<compile_context>
chip_gen: v5e
topology: v5e:2x2
jax: 0.10.0
libtpu: 0.0.40
codegen_flags: <defaults>
</compile_context>

<pallas_src>
import functools

import jax
import jax.numpy as jnp
import numpy as np
from jax.experimental import pallas as pl
from jax.experimental.pallas import tpu as pltpu

WIDTH = 4                      # module `width` (primal channels)
H, W = 16, 16                  # spatial size
B = 2                          # image batch; packed batch = B * 3 colors
BC = B * 3                     # 6
P = 2 * WIDTH                  # conv1 input channels (cat([primal_adj, primal]))
HID = 2 * P                    # conv1 output / conv2 input channels

LANES = 128
RPB = H * W * WIDTH // LANES   # dense (., 128) rows per batch element  (= 8)
HL = H // 2                    # x-line pairs per batch element         (= 8)
DROWS = BC * RPB               # total dense rows                       (= 48)
KLINE = (W + 2) * P            # one zero-padded x-line                 (= 144)
K1 = 4 * KLINE                 # conv1 contraction (4 padded lines)     (= 576)
N1 = 2 * W * HID               # conv1 output width (2 lines)           (= 512)
N2 = 2 * W * WIDTH             # conv2 output width (2 lines, dense)    (= 128)

# layout assumptions (review correctness concern: make them explicit)
assert (H * W * WIDTH) % LANES == 0
assert 2 * W * WIDTH == LANES          # one dense row == one pair of x-lines
assert H % 2 == 0
assert RPB == HL                       # dense rows and line pairs line up 1:1


def primal_block_kernel(primal_ref, image_ref, gain_ref, lhs_ref,
                        w1_ref, b1_ref, w2_ref, b2_ref,
                        primal_out_ref, dual_out_ref):
    nb = primal_ref.shape[0] // RPB               # batch elements in this step

    primal_d = primal_ref[...]                    # (nb*RPB, 128) dense NHWC
    image_d = image_ref[...]                      # (nb*RPB, 128)
    gain_d = gain_ref[...]                        # (RPB, 128)

    # ---- dual = image - camera.forward(primal)   (lane-dense, f32 VPU) ----
    # reshape only splits the leading dim at a sublane-tile boundary (RPB=8).
    pr3 = primal_d.reshape(nb, RPB, LANES)
    im3 = image_d.reshape(nb, RPB, LANES)
    dual3 = im3 - gain_d[None] * pr3
    dual_out_ref[...] = dual3.reshape(nb * RPB, LANES)   # full-width vst

    # ---- conv1 (3x3 "same") as ONE lane-dense block-Toeplitz matmul ----
    h = jnp.dot(lhs_ref[...], w1_ref[...], preferred_element_type=jnp.float32)
    h = jnp.maximum(h + b1_ref[...], 0.0)         # (nb*RPB, 512)

    # ---- conv2 (1x1) as a block-diagonal matmul; result is already in the
    #      dense NHWC line-pair layout -> residual add, full-width store ----
    out = jnp.dot(h, w2_ref[...], preferred_element_type=jnp.float32) + b2_ref[...]
    primal_out_ref[...] = primal_d + out          # (nb*RPB, 128)


def _default_ncore():
    """2 'parallel' grid steps only where there are 2 TensorCores per chip."""
    try:
        kind = jax.devices()[0].device_kind.lower()
    except Exception:
        return 1
    return 2 if ("v7" in kind or "7x" in kind) else 1


def _toeplitz_weights(w1, b1, w2, b2):
    """Lane-dense paired block-Toeplitz weights (built once, wrapper-side XLA).

    tw[ky, xp*P + c, x*HID + o] = w1[ky, xp - x, c, o]  when 0 <= xp - x <= 2.
    """
    sel = np.zeros((3, W + 2, W), np.float32)
    for kx in range(3):
        for x in range(W):
            sel[kx, x + kx, x] = 1.0
    sel = jnp.asarray(sel)
    tw = jnp.einsum("kpx,ykco->ypcxo", sel, w1).reshape(3, KLINE, W * HID)

    # Line-pair weight: output cols [0:256] -> line y0 = 2t, [256:512] -> y1 = 2t+1.
    w1p = jnp.zeros((K1, N1), w1.dtype)
    for ky in range(3):
        w1p = w1p.at[ky * KLINE:(ky + 1) * KLINE, :W * HID].set(tw[ky])
        w1p = w1p.at[(ky + 1) * KLINE:(ky + 2) * KLINE, W * HID:].set(tw[ky])
    b1p = jnp.tile(b1, 2 * W).reshape(1, N1)

    # conv2 (1x1): block-diagonal with 2*W copies of w2 -> (512, 128).
    w2p = jnp.kron(jnp.eye(2 * W, dtype=w2.dtype), w2)
    b2p = jnp.tile(b2, 2 * W).reshape(1, N2)
    return w1p, b1p, w2p, b2p


@functools.partial(jax.jit, static_argnames=("ncore",))
def primal_block(primal, image, gain, w1, b1, w2, b2, *, ncore=None):
    """primal, image: (BC, H, W, WIDTH) f32; gain: (H, W, WIDTH) f32;
    w1: (3, 3, P, HID) HWIO; b1: (HID,); w2: (HID, WIDTH); b2: (WIDTH,)."""
    if ncore is None:
        ncore = _default_ncore()
    assert BC % ncore == 0
    nb = BC // ncore
    rows = nb * RPB                    # dense (., 128) rows per grid step

    # lane-dense NHWC views (pure reshapes: contiguous row-major)
    primal_d = primal.reshape(DROWS, LANES)
    image_d = image.reshape(DROWS, LANES)
    gain_d = gain.reshape(RPB, LANES)

    # ---- wrapper-side (plain XLA) camera adjoint + padded x-line LHS ----
    # TODO(synk): camera modeled as self-adjoint per-pixel diagonal gain.
    adj = gain[None] * (image - gain[None] * primal)      # camera.adjoint(dual)
    cat = jnp.concatenate([adj, primal], axis=-1)         # (BC, H, W, P)
    lines = jnp.pad(cat, ((0, 0), (1, 1), (1, 1), (0, 0))).reshape(BC, H + 2, KLINE)
    # LHS row (n, t) = concat of padded lines 2t..2t+3 (covers output rows 2t, 2t+1)
    lhs = jnp.concatenate([lines[:, a:a + H - 1:2] for a in range(4)],
                          axis=-1).reshape(BC * HL, K1)   # (48, 576)

    w1p, b1p, w2p, b2p = _toeplitz_weights(w1, b1, w2, b2)

    blk = lambda i: (i, 0)
    fix = lambda i: (0, 0)

    primal_o, dual_o = pl.pallas_call(
        primal_block_kernel,
        out_shape=(jax.ShapeDtypeStruct((DROWS, LANES), jnp.float32),
                   jax.ShapeDtypeStruct((DROWS, LANES), jnp.float32)),
        grid_spec=pltpu.PrefetchScalarGridSpec(
            num_scalar_prefetch=0,
            grid=(ncore,),
            in_specs=[
                pl.BlockSpec((rows, LANES), blk),    # primal (dense)
                pl.BlockSpec((rows, LANES), blk),    # image (dense)
                pl.BlockSpec((RPB, LANES), fix),     # camera gain (dense)
                pl.BlockSpec((rows, K1), blk),       # conv1 LHS (padded line pairs)
                pl.BlockSpec((K1, N1), fix),         # conv1 block-Toeplitz weight
                pl.BlockSpec((1, N1), fix),          # conv1 bias (tiled)
                pl.BlockSpec((N1, N2), fix),         # conv2 block-diagonal weight
                pl.BlockSpec((1, N2), fix),          # conv2 bias (tiled)
            ],
            out_specs=(
                pl.BlockSpec((rows, LANES), blk),    # new primal (dense)
                pl.BlockSpec((rows, LANES), blk),    # new dual (dense)
            ),
        ),
        compiler_params=pltpu.CompilerParams(
            dimension_semantics=("parallel",)),
    )(primal_d, image_d, gain_d, lhs, w1p, b1p, w2p, b2p)

    return (primal_o.reshape(BC, H, W, WIDTH),
            dual_o.reshape(BC, H, W, WIDTH))


def reference(primal, image, gain, w1, b1, w2, b2):
    """Plain-JAX reference of the same forward pass (NHWC)."""
    dual = image - gain[None] * primal
    primal_adj = gain[None] * dual
    cat = jnp.concatenate([primal_adj, primal], axis=-1)
    h = jax.lax.conv_general_dilated(
        cat, w1, window_strides=(1, 1), padding="SAME",
        dimension_numbers=("NHWC", "HWIO", "NHWC"),
        precision=jax.lax.Precision.HIGHEST)
    h = jax.nn.relu(h + b1)
    out = jnp.einsum("nhwc,co->nhwo", h, w2,
                     precision=jax.lax.Precision.HIGHEST) + b2
    return primal + out, dual


if __name__ == "__main__":
    key = jax.random.PRNGKey(0)
    ks = jax.random.split(key, 7)

    primal = jax.random.normal(ks[0], (BC, H, W, WIDTH), jnp.float32)
    image = jax.random.normal(ks[1], (BC, H, W, WIDTH), jnp.float32)
    gain = 0.5 + 0.5 * jax.random.uniform(ks[2], (H, W, WIDTH), jnp.float32)

    # deterministic synthetic parameters (shapes from nn.Conv2d(p, 2p, 3) and
    # nn.Conv2d(2p, w, 1) with p = 2*width), stored HWIO / (in, out)
    w1 = 0.1 * jax.random.normal(ks[3], (3, 3, P, HID), jnp.float32)
    b1 = 0.1 * jax.random.normal(ks[4], (HID,), jnp.float32)
    w2 = 0.1 * jax.random.normal(ks[5], (HID, WIDTH), jnp.float32)
    b2 = 0.1 * jax.random.normal(ks[6], (WIDTH,), jnp.float32)

    primal_out, dual_out = primal_block(primal, image, gain, w1, b1, w2, b2)
    jax.block_until_ready((primal_out, dual_out))

    primal_exp, dual_exp = reference(primal, image, gain, w1, b1, w2, b2)
    assert jnp.allclose(dual_out, dual_exp, atol=1e-4, rtol=1e-4)
    assert jnp.allclose(primal_out, primal_exp, atol=2e-3, rtol=2e-3)

    print("KERNEL_OK")
</pallas_src>

<mosaic_0001>
module attributes {stable_mosaic.version = 11 : i64} {
  func.func @primal_block_kernel(%arg0: i32, %arg1: memref<48x128xf32, #tpu.memory_space<vmem>>, %arg2: memref<48x128xf32, #tpu.memory_space<vmem>>, %arg3: memref<8x128xf32, #tpu.memory_space<vmem>>, %arg4: memref<48x576xf32, #tpu.memory_space<vmem>>, %arg5: memref<576x512xf32, #tpu.memory_space<vmem>>, %arg6: memref<1x512xf32, #tpu.memory_space<vmem>>, %arg7: memref<512x128xf32, #tpu.memory_space<vmem>>, %arg8: memref<1x128xf32, #tpu.memory_space<vmem>>, %arg9: memref<48x128xf32, #tpu.memory_space<vmem>>, %arg10: memref<48x128xf32, #tpu.memory_space<vmem>>) attributes {dimension_semantics = [#tpu.dimension_semantics<parallel>], iteration_bounds = array<i64: 1>, scalar_prefetch = 0 : i64, scratch_operands = 0 : i64, tpu.core_type = #tpu.core_type<tc>, window_params = [{transform_indices = @transform_0, window_bounds = array<i64: 48, 128>}, {transform_indices = @transform_1, window_bounds = array<i64: 48, 128>}, {pipeline_mode = #tpu.pipeline_mode<synchronous>, transform_indices = @transform_2, window_bounds = array<i64: 8, 128>}, {transform_indices = @transform_3, window_bounds = array<i64: 48, 576>}, {pipeline_mode = #tpu.pipeline_mode<synchronous>, transform_indices = @transform_4, window_bounds = array<i64: 576, 512>}, {pipeline_mode = #tpu.pipeline_mode<synchronous>, transform_indices = @transform_5, window_bounds = array<i64: 1, 512>}, {pipeline_mode = #tpu.pipeline_mode<synchronous>, transform_indices = @transform_6, window_bounds = array<i64: 512, 128>}, {pipeline_mode = #tpu.pipeline_mode<synchronous>, transform_indices = @transform_7, window_bounds = array<i64: 1, 128>}, {transform_indices = @transform_8, window_bounds = array<i64: 48, 128>}, {transform_indices = @transform_9, window_bounds = array<i64: 48, 128>}]} {
    %c0 = arith.constant 0 : index
    %c0_0 = arith.constant 0 : index
    %0 = vector.load %arg1[%c0, %c0_0] : memref<48x128xf32, #tpu.memory_space<vmem>>, vector<48x128xf32>
    %c0_1 = arith.constant 0 : index
    %c0_2 = arith.constant 0 : index
    %1 = vector.load %arg2[%c0_1, %c0_2] : memref<48x128xf32, #tpu.memory_space<vmem>>, vector<48x128xf32>
    %c0_3 = arith.constant 0 : index
    %c0_4 = arith.constant 0 : index
    %2 = vector.load %arg3[%c0_3, %c0_4] : memref<8x128xf32, #tpu.memory_space<vmem>>, vector<8x128xf32>
    %3 = vector.shape_cast %0 : vector<48x128xf32> to vector<6x8x128xf32>
    %4 = vector.shape_cast %1 : vector<48x128xf32> to vector<6x8x128xf32>
    %5 = vector.shape_cast %2 : vector<8x128xf32> to vector<1x8x128xf32>
    %6 = vector.broadcast %5 : vector<1x8x128xf32> to vector<6x8x128xf32>
    %7 = arith.mulf %6, %3 : vector<6x8x128xf32>
    %8 = arith.subf %4, %7 : vector<6x8x128xf32>
    %9 = vector.shape_cast %8 : vector<6x8x128xf32> to vector<48x128xf32>
    %c0_5 = arith.constant 0 : index
    %c0_6 = arith.constant 0 : index
    %10 = vector.load %arg10[%c0_5, %c0_6] : memref<48x128xf32, #tpu.memory_space<vmem>>, vector<48x128xf32>
    tpu.vector_store %arg10[%c0_5, %c0_6], %9 {strides = array<i32>} : memref<48x128xf32, #tpu.memory_space<vmem>>, vector<48x128xf32>,
    %c0_7 = arith.constant 0 : index
    %c0_8 = arith.constant 0 : index
    %11 = vector.load %arg4[%c0_7, %c0_8] : memref<48x576xf32, #tpu.memory_space<vmem>>, vector<48x576xf32>
    %c0_9 = arith.constant 0 : index
    %c0_10 = arith.constant 0 : index
    %12 = vector.load %arg5[%c0_9, %c0_10] : memref<576x512xf32, #tpu.memory_space<vmem>>, vector<576x512xf32>
    %cst = arith.constant dense<0.000000e+00> : vector<48x512xf32>
    %13 = tpu.matmul %11, %12, %cst {dimension_numbers = #tpu.dot_dimension_numbers<[1], [0], [0], [1], [0, 0, 1, 1], [], []>} : vector<48x576xf32>, vector<576x512xf32>, vector<48x512xf32> -> vector<48x512xf32>
    %c0_11 = arith.constant 0 : index
    %c0_12 = arith.constant 0 : index
    %14 = vector.load %arg6[%c0_11, %c0_12] : memref<1x512xf32, #tpu.memory_space<vmem>>, vector<1x512xf32>
    %15 = vector.broadcast %14 : vector<1x512xf32> to vector<48x512xf32>
    %16 = arith.addf %13, %15 : vector<48x512xf32>
    %cst_13 = arith.constant 0.000000e+00 : f32
    %17 = vector.broadcast %cst_13 : f32 to vector<48x512xf32>
    %18 = arith.maximumf %16, %17 : vector<48x512xf32>
    %c0_14 = arith.constant 0 : index
    %c0_15 = arith.constant 0 : index
    %19 = vector.load %arg7[%c0_14, %c0_15] : memref<512x128xf32, #tpu.memory_space<vmem>>, vector<512x128xf32>
    %cst_16 = arith.constant dense<0.000000e+00> : vector<48x128xf32>
    %20 = tpu.matmul %18, %19, %cst_16 {dimension_numbers = #tpu.dot_dimension_numbers<[1], [0], [0], [1], [0, 0, 1, 1], [], []>} : vector<48x512xf32>, vector<512x128xf32>, vector<48x128xf32> -> vector<48x128xf32>
    %c0_17 = arith.constant 0 : index
    %c0_18 = arith.constant 0 : index
    %21 = vector.load %arg8[%c0_17, %c0_18] : memref<1x128xf32, #tpu.memory_space<vmem>>, vector<1x128xf32>
    %22 = vector.broadcast %21 : vector<1x128xf32> to vector<48x128xf32>
    %23 = arith.addf %20, %22 : vector<48x128xf32>
    %24 = arith.addf %0, %23 : vector<48x128xf32>
    %c0_19 = arith.constant 0 : index
    %c0_20 = arith.constant 0 : index
    %25 = vector.load %arg9[%c0_19, %c0_20] : memref<48x128xf32, #tpu.memory_space<vmem>>, vector<48x128xf32>
    tpu.vector_store %arg9[%c0_19, %c0_20], %24 {strides = array<i32>} : memref<48x128xf32, #tpu.memory_space<vmem>>, vector<48x128xf32>,
    return
  }
  func.func @transform_0(%arg0: i32) -> (i32, i32) {
    %c0_i32 = arith.constant 0 : i32
    %c0_i32_0 = arith.constant 0 : i32
    return %arg0, %c0_i32 : i32, i32
  }
  func.func @transform_1(%arg0: i32) -> (i32, i32) {
    %c0_i32 = arith.constant 0 : i32
    %c0_i32_0 = arith.constant 0 : i32
    return %arg0, %c0_i32 : i32, i32
  }
  func.func @transform_2(%arg0: i32) -> (i32, i32) {
    %c0_i32 = arith.constant 0 : i32
    %c0_i32_0 = arith.constant 0 : i32
    %c0_i32_1 = arith.constant 0 : i32
    return %c0_i32, %c0_i32_0 : i32, i32
  }
  func.func @transform_3(%arg0: i32) -> (i32, i32) {
    %c0_i32 = arith.constant 0 : i32
    %c0_i32_0 = arith.constant 0 : i32
    return %arg0, %c0_i32 : i32, i32
  }
  func.func @transform_4(%arg0: i32) -> (i32, i32) {
    %c0_i32 = arith.constant 0 : i32
    %c0_i32_0 = arith.constant 0 : i32
    %c0_i32_1 = arith.constant 0 : i32
    return %c0_i32, %c0_i32_0 : i32, i32
  }
  func.func @transform_5(%arg0: i32) -> (i32, i32) {
    %c0_i32 = arith.constant 0 : i32
    %c0_i32_0 = arith.constant 0 : i32
    %c0_i32_1 = arith.constant 0 : i32
    return %c0_i32, %c0_i32_0 : i32, i32
  }
  func.func @transform_6(%arg0: i32) -> (i32, i32) {
    %c0_i32 = arith.constant 0 : i32
    %c0_i32_0 = arith.constant 0 : i32
    %c0_i32_1 = arith.constant 0 : i32
    return %c0_i32, %c0_i32_0 : i32, i32
  }
  func.func @transform_7(%arg0: i32) -> (i32, i32) {
    %c0_i32 = arith.constant 0 : i32
    %c0_i32_0 = arith.constant 0 : i32
    %c0_i32_1 = arith.constant 0 : i32
    return %c0_i32, %c0_i32_0 : i32, i32
  }
  func.func @transform_8(%arg0: i32) -> (i32, i32) {
    %c0_i32 = arith.constant 0 : i32
    %c0_i32_0 = arith.constant 0 : i32
    return %arg0, %c0_i32 : i32, i32
  }
  func.func @transform_9(%arg0: i32) -> (i32, i32) {
    %c0_i32 = arith.constant 0 : i32
    %c0_i32_0 = arith.constant 0 : i32
    return %arg0, %c0_i32 : i32, i32
  }
}

</mosaic_0001>

<llo_original>
// kernel: tile.14
$region0: #{tile.14}
  %s0 = inlined_call_operand.vmem [shape: f32[32,16], index: 0, kind: input, shape index: {}]
  %s1 = inlined_call_operand.vmem [shape: f32[1,512], index: 1, kind: output, shape index: {}]
  $region1: #{tile.14} parent=0
    #allocation0 [shape = 'u8[16384]{0}', space=vmem, size = 0x4000, scoped, tag = 'scoped mem for output reshape']
    %v2 = vld [vmem:[%s0] ss:$8 sm:$0xf]
    %vm3 = vcmask 130048
    %4 = vst.msk [vmem:[#allocation0] ss:$8 sm:$0xf] %vm3, %v2
    %s5 = scalar_lea.vmem %s0, 7
    %v6 = vld [vmem:[%s5] ss:$8 sm:$0xf]
    %7 = vrot.lane.b32.xlu0 %v6, 112
    %v8 = vpop.permute.xlu0 %7
    %vm9 = vcmask 1048448
    %10 = vst.msk [vmem:[#allocation0] ss:$8 sm:$0xf] %vm9, %v8
    %s11 = scalar_lea.vmem %s0, 6
    %v12 = vld [vmem:[%s11] ss:$8 sm:$0xf]
    %13 = vrot.lane.b32.xlu0 %v12, 96
    %v14 = vpop.permute.xlu0 %13
    %vm15 = vcmask 917248
    %16 = vst.msk [vmem:[#allocation0] ss:$8 sm:$0xf] %vm15, %v14
    %s17 = scalar_lea.vmem %s0, 5
    %v18 = vld [vmem:[%s17] ss:$8 sm:$0xf]
    %19 = vrot.lane.b32.xlu0 %v18, 80
    %v20 = vpop.permute.xlu0 %19
    %vm21 = vcmask 786048
    %22 = vst.msk [vmem:[#allocation0] ss:$8 sm:$0xf] %vm21, %v20
    %s23 = scalar_lea.vmem %s0, 4
    %v24 = vld [vmem:[%s23] ss:$8 sm:$0xf]
    %25 = vrot.lane.b32.xlu0 %v24, 64
    %v26 = vpop.permute.xlu0 %25
    %vm27 = vcmask 654848
    %28 = vst.msk [vmem:[#allocation0] ss:$8 sm:$0xf] %vm27, %v26
    %s29 = scalar_lea.vmem %s0, 3
    %v30 = vld [vmem:[%s29] ss:$8 sm:$0xf]
    %31 = vrot.lane.b32.xlu0 %v30, 48
    %v32 = vpop.permute.xlu0 %31
    %vm33 = vcmask 523648
    %34 = vst.msk [vmem:[#allocation0] ss:$8 sm:$0xf] %vm33, %v32
    %s35 = scalar_lea.vmem %s0, 2
    %v36 = vld [vmem:[%s35] ss:$8 sm:$0xf]
    %37 = vrot.lane.b32.xlu0 %v36, 32
    %v38 = vpop.permute.xlu0 %37
    %vm39 = vcmask 392448
    %40 = vst.msk [vmem:[#allocation0] ss:$8 sm:$0xf] %vm39, %v38
    %s41 = scalar_lea.vmem %s0, 1
    %v42 = vld [vmem:[%s41] ss:$8 sm:$0xf]
    %43 = vrot.lane.b32.xlu0 %v42, 16
    %v44 = vpop.permute.xlu0 %43
    %vm45 = vcmask 261248
    %46 = vst.msk [vmem:[#allocation0] ss:$8 sm:$0xf] %vm45, %v44
    %s48 = ssub.s32 2, 1
    %v49 = vld [vmem:[#allocation0] sm:%s48]
    %s51 = ssub.s32 2, 1
    %52 = vst [vmem:[%s1] sm:%s51] %v49
    %s53 = scalar_lea.vmem [#allocation0], 8
    %v54 = vld [vmem:[%s53] sm:%s48]
    %s56 = ssub.s32 2, 1
    %s57 = scalar_lea.vmem %s1, 1
    %58 = vst [vmem:[%s57] sm:%s56] %v54
    %s59 = scalar_lea.vmem [#allocation0], 16
    %v60 = vld [vmem:[%s59] sm:%s48]
    %s62 = ssub.s32 2, 1
    %s63 = scalar_lea.vmem %s1, 2
    %64 = vst [vmem:[%s63] sm:%s62] %v60
    %s65 = scalar_lea.vmem [#allocation0], 24
    %v66 = vld [vmem:[%s65] sm:%s48]
    %s68 = ssub.s32 2, 1
    %s69 = scalar_lea.vmem %s1, 3
    %70 = vst [vmem:[%s69] sm:%s68] %v66

// kernel: tile.18
$region0: #{tile.18}
  #allocation2 [shape = 's32[1]{0}', space=sflag, size = 0x4, scoped, tag = 'scoped memory for tile.18']
  %s0 = inlined_call_operand.hbm [shape: f32[4], index: 0, kind: input, shape index: {}]
  %s1 = inlined_call_operand.vmem [shape: f32[32,4], index: 1, kind: output, shape index: {}]
  $region1: #{tile.18} parent=0
    #allocation0 [shape = 'u8[512]{0}', space=vmem, size = 0x400, scoped, tag = 'operand span for operand 0']
    #allocation1 [shape = 's32[1]{0}', space=sflag, size = 0x4, scoped, tag = 'scoped memory for tile.18']
    %2 = vsyncpa [#allocation1], 0
    // Predicated region
    $region2: #{tile.18} parent=1 // pred_check
      _
    $region3: #{tile.18} parent=1 // pred_check_branch
      %4 = sbr.rel (0) target = $region5
    $region4: #{tile.18} parent=1 // pred_region
      %6 = vsyncadd [#allocation1], 0
      %s8 = sshll.u32 %s0, 4
      %s9 = int_to_ptr.hbm [resolvable:$true] %s8
      %s10 = sshll.u32 [#allocation0], 4
      %s11 = int_to_ptr.vmem [resolvable:$true] %s10
      %13 = dma.hbm_to_vmem [thread:$0]  %s9, 16, %s11, [#allocation1]
    $region5: #{tile.18} parent=1 // pred_fallthru
      _
    // Predicated region
    $region6: #{tile.18} parent=1 // pred_check
      _
    $region7: #{tile.18} parent=1 // pred_check_branch
      %15 = sbr.rel (0) target = $region9
    $region8: #{tile.18} parent=1 // pred_region
      %17 = dma.done [#allocation1], 16
    $region9: #{tile.18} parent=1 // pred_fallthru
      _
    %v18 = vld [vmem:[#allocation0] ss:$0 sm:$0xff]
    %19 = vst [vmem:[%s1] sm:$0xff] %v18
    %s20 = scalar_lea.vmem %s1, 8
    %21 = vst [vmem:[%s20] sm:$0xff] %v18
    %s22 = scalar_lea.vmem %s1, 16
    %23 = vst [vmem:[%s22] sm:$0xff] %v18
    %s24 = scalar_lea.vmem %s1, 24
    %25 = vst [vmem:[%s24] sm:$0xff] %v18
    %26 = vsyncpa [#allocation1], 1

// kernel: tile.13
$region0: #{tile.13}
  #allocation2 [shape = 's32[1]{0}', space=sflag, size = 0x4, scoped, tag = 'scoped memory for tile.13']
  %s0 = inlined_call_operand.hbm [shape: f32[16], index: 0, kind: input, shape index: {}]
  %s1 = inlined_call_operand.vmem [shape: f32[32,16], index: 1, kind: output, shape index: {}]
  $region1: #{tile.13} parent=0
    #allocation0 [shape = 'u8[512]{0}', space=vmem, size = 0x400, scoped, tag = 'operand span for operand 0']
    #allocation1 [shape = 's32[1]{0}', space=sflag, size = 0x4, scoped, tag = 'scoped memory for tile.13']
    %2 = vsyncpa [#allocation1], 0
    // Predicated region
    $region2: #{tile.13} parent=1 // pred_check
      _
    $region3: #{tile.13} parent=1 // pred_check_branch
      %4 = sbr.rel (0) target = $region5
    $region4: #{tile.13} parent=1 // pred_region
      %6 = vsyncadd [#allocation1], 0
      %s8 = sshll.u32 %s0, 4
      %s9 = int_to_ptr.hbm [resolvable:$true] %s8
      %s10 = sshll.u32 [#allocation0], 4
      %s11 = int_to_ptr.vmem [resolvable:$true] %s10
      %13 = dma.hbm_to_vmem [thread:$0]  %s9, 16, %s11, [#allocation1]
    $region5: #{tile.13} parent=1 // pred_fallthru
      _
    // Predicated region
    $region6: #{tile.13} parent=1 // pred_check
      _
    $region7: #{tile.13} parent=1 // pred_check_branch
      %15 = sbr.rel (0) target = $region9
    $region8: #{tile.13} parent=1 // pred_region
      %17 = dma.done [#allocation1], 16
    $region9: #{tile.13} parent=1 // pred_fallthru
      _
    %v18 = vld [vmem:[#allocation0] ss:$0 sm:$0xff]
    %19 = vst [vmem:[%s1] sm:$0xff] %v18
    %s20 = scalar_lea.vmem %s1, 8
    %21 = vst [vmem:[%s20] sm:$0xff] %v18
    %s22 = scalar_lea.vmem %s1, 16
    %23 = vst [vmem:[%s22] sm:$0xff] %v18
    %s24 = scalar_lea.vmem %s1, 24
    %25 = vst [vmem:[%s24] sm:$0xff] %v18
    %26 = vsyncpa [#allocation1], 1

// kernel: tile.19
$region0: #{tile.19}
  %s0 = inlined_call_operand.vmem [shape: f32[32,4], index: 0, kind: input, shape index: {}]
  %s1 = inlined_call_operand.vmem [shape: f32[1,128], index: 1, kind: output, shape index: {}]
  $region1: #{tile.19} parent=0
    #allocation0 [shape = 'u8[4096]{0}', space=vmem, size = 0x1000, scoped, tag = 'scoped mem for output reshape']
    %v2 = vld [vmem:[%s0] sm:$0x1]
    %vm3 = vcmask 31744
    %4 = vst.msk [vmem:[#allocation0] sm:$0x1] %vm3, %v2
    %s5 = scalar_lea.vmem %s0, 31
    %v6 = vld [vmem:[%s5] sm:$0x1]
    %7 = vrot.lane.b32.xlu0 %v6, 124
    %v8 = vpop.permute.xlu0 %7
    %vm9 = vcmask 1048544
    %10 = vst.msk [vmem:[#allocation0] sm:$0x1] %vm9, %v8
    %s11 = scalar_lea.vmem %s0, 30
    %v12 = vld [vmem:[%s11] sm:$0x1]
    %13 = vrot.lane.b32.xlu0 %v12, 120
    %v14 = vpop.permute.xlu0 %13
    %vm15 = vcmask 1015744
    %16 = vst.msk [vmem:[#allocation0] sm:$0x1] %vm15, %v14
    %s17 = scalar_lea.vmem %s0, 29
    %v18 = vld [vmem:[%s17] sm:$0x1]
    %19 = vrot.lane.b32.xlu0 %v18, 116
    %v20 = vpop.permute.xlu0 %19
    %vm21 = vcmask 982944
    %22 = vst.msk [vmem:[#allocation0] sm:$0x1] %vm21, %v20
    %s23 = scalar_lea.vmem %s0, 28
    %v24 = vld [vmem:[%s23] sm:$0x1]
    %25 = vrot.lane.b32.xlu0 %v24, 112
    %v26 = vpop.permute.xlu0 %25
    %vm27 = vcmask 950144
    %28 = vst.msk [vmem:[#allocation0] sm:$0x1] %vm27, %v26
    %s29 = scalar_lea.vmem %s0, 27
    %v30 = vld [vmem:[%s29] sm:$0x1]
    %31 = vrot.lane.b32.xlu0 %v30, 108
    %v32 = vpop.permute.xlu0 %31
    %vm33 = vcmask 917344
    %34 = vst.msk [vmem:[#allocation0] sm:$0x1] %vm33, %v32
    %s35 = scalar_lea.vmem %s0, 26
    %v36 = vld [vmem:[%s35] sm:$0x1]
    %37 = vrot.lane.b32.xlu0 %v36, 104
    %v38 = vpop.permute.xlu0 %37
    %vm39 = vcmask 884544
    %40 = vst.msk [vmem:[#allocation0] sm:$0x1] %vm39, %v38
    %s41 = scalar_lea.vmem %s0, 25
    %v42 = vld [vmem:[%s41] sm:$0x1]
    %43 = vrot.lane.b32.xlu0 %v42, 100
    %v44 = vpop.permute.xlu0 %43
    %vm45 = vcmask 851744
    %46 = vst.msk [vmem:[#allocation0] sm:$0x1] %vm45, %v44
    %s47 = scalar_lea.vmem %s0, 24
    %v48 = vld [vmem:[%s47] sm:$0x1]
    %49 = vrot.lane.b32.xlu0 %v48, 96
    %v50 = vpop.permute.xlu0 %49
    %vm51 = vcmask 818944
    %52 = vst.msk [vmem:[#allocation0] sm:$0x1] %vm51, %v50
    %s53 = scalar_lea.vmem %s0, 23
    %v54 = vld [vmem:[%s53] sm:$0x1]
    %55 = vrot.lane.b32.xlu0 %v54, 92
    %v56 = vpop.permute.xlu0 %55
    %vm57 = vcmask 786144
    %58 = vst.msk [vmem:[#allocation0] sm:$0x1] %vm57, %v56
    %s59 = scalar_lea.vmem %s0, 22
    %v60 = vld [vmem:[%s59] sm:$0x1]
    %61 = vrot.lane.b32.xlu0 %v60, 88
    %v62 = vpop.permute.xlu0 %61
    %vm63 = vcmask 753344
    %64 = vst.msk [vmem:[#allocation0] sm:$0x1] %vm63, %v62
    %s65 = scalar_lea.vmem %s0, 21
    %v66 = vld [vmem:[%s65] sm:$0x1]
    %67 = vrot.lane.b32.xlu0 %v66, 84
    %v68 = vpop.permute.xlu0 %67
    %vm69 = vcmask 720544
    %70 = vst.msk [vmem:[#allocation0] sm:$0x1] %vm69, %v68
    %s71 = scalar_lea.vmem %s0, 20
    %v72 = vld [vmem:[%s71] sm:$0x1]
    %73 = vrot.lane.b32.xlu0 %v72, 80
    %v74 = vpop.permute.xlu0 %73
    %vm75 = vcmask 687744
    %76 = vst.msk [vmem:[#allocation0] sm:$0x1] %vm75, %v74
    %s77 = scalar_lea.vmem %s0, 19
    %v78 = vld [vmem:[%s77] sm:$0x1]
    %79 = vrot.lane.b32.xlu0 %v78, 76
    %v80 = vpop.permute.xlu0 %79
    %vm81 = vcmask 654944
    %82 = vst.msk [vmem:[#allocation0] sm:$0x1] %vm81, %v80
    %s83 = scalar_lea.vmem %s0, 18
    %v84 = vld [vmem:[%s83] sm:$0x1]
    %85 = vrot.lane.b32.xlu0 %v84, 72
    %v86 = vpop.permute.xlu0 %85
    %vm87 = vcmask 622144
    %88 = vst.msk [vmem:[#allocation0] sm:$0x1] %vm87, %v86
    %s89 = scalar_lea.vmem %s0, 17
    %v90 = vld [vmem:[%s89] sm:$0x1]
    %91 = vrot.lane.b32.xlu0 %v90, 68
    %v92 = vpop.permute.xlu0 %91
    %vm93 = vcmask 589344
    %94 = vst.msk [vmem:[#allocation0] sm:$0x1] %vm93, %v92
    %s95 = scalar_lea.vmem %s0, 16
    %v96 = vld [vmem:[%s95] sm:$0x1]
    %97 = vrot.lane.b32.xlu0 %v96, 64
    %v98 = vpop.permute.xlu0 %97
    %vm99 = vcmask 556544
    %100 = vst.msk [vmem:[#allocation0] sm:$0x1] %vm99, %v98
    %s101 = scalar_lea.vmem %s0, 15
    %v102 = vld [vmem:[%s101] sm:$0x1]
    %103 = vrot.lane.b32.xlu0 %v102, 60
    %v104 = vpop.permute.xlu0 %103
    %vm105 = vcmask 523744
    %106 = vst.msk [vmem:[#allocation0] sm:$0x1] %vm105, %v104
    %s107 = scalar_lea.vmem %s0, 14
    %v108 = vld [vmem:[%s107] sm:$0x1]
    %109 = vrot.lane.b32.xlu0 %v108, 56
    %v110 = vpop.permute.xlu0 %109
    %vm111 = vcmask 490944
    %112 = vst.msk [vmem:[#allocation0] sm:$0x1] %vm111, %v110
    %s113 = scalar_lea.vmem %s0, 13
    %v114 = vld [vmem:[%s113] sm:$0x1]
    %115 = vrot.lane.b32.xlu0 %v114, 52
    %v116 = vpop.permute.xlu0 %115
    %vm117 = vcmask 458144
    %118 = vst.msk [vmem:[#allocation0] sm:$0x1] %vm117, %v116
    %s119 = scalar_lea.vmem %s0, 12
    %v120 = vld [vmem:[%s119] sm:$0x1]
    %121 = vrot.lane.b32.xlu0 %v120, 48
    %v122 = vpop.permute.xlu0 %121
    %vm123 = vcmask 425344
    %124 = vst.msk [vmem:[#allocation0] sm:$0x1] %vm123, %v122
    %s125 = scalar_lea.vmem %s0, 11
    %v126 = vld [vmem:[%s125] sm:$0x1]
    %127 = vrot.lane.b32.xlu0 %v126, 44
    %v128 = vpop.permute.xlu0 %127
    %vm129 = vcmask 392544
    %130 = vst.msk [vmem:[#allocation0] sm:$0x1] %vm129, %v128
    %s131 = scalar_lea.vmem %s0, 10
    %v132 = vld [vmem:[%s131] sm:$0x1]
    %133 = vrot.lane.b32.xlu0 %v132, 40
    %v134 = vpop.permute.xlu0 %133
    %vm135 = vcmask 359744
    %136 = vst.msk [vmem:[#allocation0] sm:$0x1] %vm135, %v134
    %s137 = scalar_lea.vmem %s0, 9
    %v138 = vld [vmem:[%s137] sm:$0x1]
    %139 = vrot.lane.b32.xlu0 %v138, 36
    %v140 = vpop.permute.xlu0 %139
    %vm141 = vcmask 326944
    %142 = vst.msk [vmem:[#allocation0] sm:$0x1] %vm141, %v140
    %s143 = scalar_lea.vmem %s0, 8
    %v144 = vld [vmem:[%s143] sm:$0x1]
    %145 = vrot.lane.b32.xlu0 %v144, 32
    %v146 = vpop.permute.xlu0 %145
    %vm147 = vcmask 294144
    %148 = vst.msk [vmem:[#allocation0] sm:$0x1] %vm147, %v146
    %s149 = scalar_lea.vmem %s0, 7
    %v150 = vld [vmem:[%s149] sm:$0x1]
    %151 = vrot.lane.b32.xlu0 %v150, 28
    %v152 = vpop.permute.xlu0 %151
    %vm153 = vcmask 261344
    %154 = vst.msk [vmem:[#allocation0] sm:$0x1] %vm153, %v152
    %s155 = scalar_lea.vmem %s0, 6
    %v156 = vld [vmem:[%s155] sm:$0x1]
    %157 = vrot.lane.b32.xlu0 %v156, 24
    %v158 = vpop.permute.xlu0 %157
    %vm159 = vcmask 228544
    %160 = vst.msk [vmem:[#allocation0] sm:$0x1] %vm159, %v158
    %s161 = scalar_lea.vmem %s0, 5
    %v162 = vld [vmem:[%s161] sm:$0x1]
    %163 = vrot.lane.b32.xlu0 %v162, 20
    %v164 = vpop.permute.xlu0 %163
    %vm165 = vcmask 195744
    %166 = vst.msk [vmem:[#allocation0] sm:$0x1] %vm165, %v164
    %s167 = scalar_lea.vmem %s0, 4
    %v168 = vld [vmem:[%s167] sm:$0x1]
    %169 = vrot.lane.b32.xlu0 %v168, 16
    %v170 = vpop.permute.xlu0 %169
    %vm171 = vcmask 162944
    %172 = vst.msk [vmem:[#allocation0] sm:$0x1] %vm171, %v170
    %s173 = scalar_lea.vmem %s0, 3
    %v174 = vld [vmem:[%s173] sm:$0x1]
    %175 = vrot.lane.b32.xlu0 %v174, 12
    %v176 = vpop.permute.xlu0 %175
    %vm177 = vcmask 130144
    %178 = vst.msk [vmem:[#allocation0] sm:$0x1] %vm177, %v176
    %s179 = scalar_lea.vmem %s0, 2
    %v180 = vld [vmem:[%s179] sm:$0x1]
    %181 = vrot.lane.b32.xlu0 %v180, 8
    %v182 = vpop.permute.xlu0 %181
    %vm183 = vcmask 97344
    %184 = vst.msk [vmem:[#allocation0] sm:$0x1] %vm183, %v182
    %s185 = scalar_lea.vmem %s0, 1
    %v186 = vld [vmem:[%s185] sm:$0x1]
    %187 = vrot.lane.b32.xlu0 %v186, 4
    %v188 = vpop.permute.xlu0 %187
    %vm189 = vcmask 64544
    %190 = vst.msk [vmem:[#allocation0] sm:$0x1] %vm189, %v188
    %s192 = ssub.s32 2, 1
    %v193 = vld [vmem:[#allocation0] sm:%s192]
    %s195 = ssub.s32 2, 1
    %196 = vst [vmem:[%s1] sm:%s195] %v193

// kernel: primal_block.1
$region0: #{primal_block.1}
  #allocation0 [shape = 'u32[]', space=smem, size = 0x4, offset = 0x4, fixed_abs, tag = 'smem constant byte address 0x4 - core index']
  #allocation1 [shape = 'u32[72,128]{1,0:T(1,128)}', space=vmem, size = 0x9000, scoped, tag = 'internal scratch']
  %s0 = inlined_call_operand.vmem [shape: f32[48,128], index: 0, kind: input, shape index: {}]
  %s1 = inlined_call_operand.vmem [shape: f32[48,128], index: 1, kind: input, shape index: {}]
  %s2 = inlined_call_operand.vmem [shape: f32[8,128], index: 2, kind: input, shape index: {}]
  %s3 = inlined_call_operand.vmem [shape: f32[48,576], index: 3, kind: input, shape index: {}]
  %s4 = inlined_call_operand.vmem [shape: f32[576,512], index: 4, kind: input, shape index: {}]
  %s5 = inlined_call_operand.vmem [shape: f32[1,512], index: 5, kind: input, shape index: {}]
  %s6 = inlined_call_operand.vmem [shape: f32[512,128], index: 6, kind: input, shape index: {}]
  %s7 = inlined_call_operand.vmem [shape: f32[1,128], index: 7, kind: input, shape index: {}]
  %s8 = inlined_call_operand.vmem [shape: f32[48,128], index: 8, kind: output, shape index: {0}]
  %s9 = inlined_call_operand.vmem [shape: f32[48,128], index: 9, kind: output, shape index: {1}]
  %10 = xla_tuple %s8, %s9
  %s11 = sld [smem:[#allocation0]]
  $region50: #{primal_block.1} parent=0
    _
  %s13 = ssub.s32 1, %s11
  %s14 = scalar_select 0, %s13, %s11
  // Predicated region
  $region2: #{primal_block.1} parent=0 // pred_check
    _
  $region3: #{primal_block.1} parent=0 // pred_check_branch
    %16 = sbr.rel (0) target = $region5
  $region4: #{primal_block.1} parent=0 // pred_region
    _
  $region5: #{primal_block.1} parent=0 // pred_fallthru
    _
  // Predicated region
  $region6: #{primal_block.1} parent=0 // pred_check
    _
  $region7: #{primal_block.1} parent=0 // pred_check_branch
    %18 = sbr.rel (0) target = $region9
  $region8: #{primal_block.1} parent=0 // pred_region
    _
  $region9: #{primal_block.1} parent=0 // pred_fallthru
    _
  // Predicated region
  $region10: #{primal_block.1} parent=0 // pred_check
    _
  $region11: #{primal_block.1} parent=0 // pred_check_branch
    %20 = sbr.rel (0) target = $region13
  $region12: #{primal_block.1} parent=0 // pred_region
    _
  $region13: #{primal_block.1} parent=0 // pred_fallthru
    _
  // Predicated region
  $region14: #{primal_block.1} parent=0 // pred_check
    _
  $region15: #{primal_block.1} parent=0 // pred_check_branch
    %22 = sbr.rel (0) target = $region17
  $region16: #{primal_block.1} parent=0 // pred_region
    _
  $region17: #{primal_block.1} parent=0 // pred_fallthru
    _
  // Predicated region
  $region18: #{primal_block.1} parent=0 // pred_check
    _
  $region19: #{primal_block.1} parent=0 // pred_check_branch
    %24 = sbr.rel (0) target = $region21
  $region20: #{primal_block.1} parent=0 // pred_region
    _
  $region21: #{primal_block.1} parent=0 // pred_fallthru
    _
  // Predicated region
  $region22: #{primal_block.1} parent=0 // pred_check
    _
  $region23: #{primal_block.1} parent=0 // pred_check_branch
    %26 = sbr.rel (0) target = $region25
  $region24: #{primal_block.1} parent=0 // pred_region
    _
  $region25: #{primal_block.1} parent=0 // pred_fallthru
    _
  // Predicated region
  $region26: #{primal_block.1} parent=0 // pred_check
    _
  $region27: #{primal_block.1} parent=0 // pred_check_branch
    %28 = sbr.rel (0) target = $region29
  $region28: #{primal_block.1} parent=0 // pred_region
    _
  $region29: #{primal_block.1} parent=0 // pred_fallthru
    _
  // Predicated region
  $region30: #{primal_block.1} parent=0 // pred_check
    _
  $region31: #{primal_block.1} parent=0 // pred_check_branch
    %30 = sbr.rel (0) target = $region33
  $region32: #{primal_block.1} parent=0 // pred_region
    _
  $region33: #{primal_block.1} parent=0 // pred_fallthru
    _
  %v31 = vld [vmem:[%s0] sm:$0xff]
  %v32 = vld [vmem:[%s0 + $0x8] sm:$0xff]
  %v33 = vld [vmem:[%s0 + $0x10] sm:$0xff]
  %v34 = vld [vmem:[%s0 + $0x18] sm:$0xff]
  %v35 = vld [vmem:[%s0 + $0x20] sm:$0xff]
  %v36 = vld [vmem:[%s0 + $0x28] sm:$0xff]
  %v37 = vld [vmem:[%s1] sm:$0xff]
  %v38 = vld [vmem:[%s1 + $0x8] sm:$0xff]
  %v39 = vld [vmem:[%s1 + $0x10] sm:$0xff]
  %v40 = vld [vmem:[%s1 + $0x18] sm:$0xff]
  %v41 = vld [vmem:[%s1 + $0x20] sm:$0xff]
  %v42 = vld [vmem:[%s1 + $0x28] sm:$0xff]
  %v43 = vld [vmem:[%s2] sm:$0xff]
  %v44 = vmul.f32 %v43, %v31
  %v45 = vmul.f32 %v43, %v32
  %v46 = vmul.f32 %v43, %v33
  %v47 = vmul.f32 %v43, %v34
  %v48 = vmul.f32 %v43, %v35
  %v49 = vmul.f32 %v43, %v36
  %v50 = vsub.f32 %v37, %v44
  %v51 = vsub.f32 %v38, %v45
  %v52 = vsub.f32 %v39, %v46
  %v53 = vsub.f32 %v40, %v47
  %v54 = vsub.f32 %v41, %v48
  %v55 = vsub.f32 %v42, %v49
  %56 = vst [vmem:[%s9] sm:$0xff] %v50
  %57 = vst [vmem:[%s9 + $0x8] sm:$0xff] %v51
  %58 = vst [vmem:[%s9 + $0x10] sm:$0xff] %v52
  %59 = vst [vmem:[%s9 + $0x18] sm:$0xff] %v53
  %60 = vst [vmem:[%s9 + $0x20] sm:$0xff] %v54
  %61 = vst [vmem:[%s9 + $0x28] sm:$0xff] %v55
  %v62 = vld [vmem:[%s3] sm:$0xff]
  %v63 = vld [vmem:[%s3 + $0x8] sm:$0xff]
  %v64 = vld [vmem:[%s3 + $0x10] sm:$0xff]
  %v65 = vld [vmem:[%s3 + $0x18] sm:$0xff]
  %v66 = vld [vmem:[%s3 + $0x20] sm:$0xff]
  %v67 = vld [vmem:[%s3 + $0x28] sm:$0xff]
  %v68 = vld [vmem:[%s3 + $0x30] sm:$0xff]
  %v69 = vld [vmem:[%s3 + $0x38] sm:$0xff]
  %v70 = vld [vmem:[%s3 + $0x40] sm:$0xff]
  %v71 = vld [vmem:[%s3 + $0x48] sm:$0xff]
  %v72 = vld [vmem:[%s3 + $0x50] sm:$0xff]
  %v73 = vld [vmem:[%s3 + $0x58] sm:$0xff]
  %v74 = vld [vmem:[%s3 + $0x60] sm:$0xff]
  %v75 = vld [vmem:[%s3 + $0x68] sm:$0xff]
  %v76 = vld [vmem:[%s3 + $0x70] sm:$0xff]
  %v77 = vld [vmem:[%s3 + $0x78] sm:$0xff]
  %v78 = vld [vmem:[%s3 + $0x80] sm:$0xff]
  %v79 = vld [vmem:[%s3 + $0x88] sm:$0xff]
  %v80 = vld [vmem:[%s3 + $0x90] sm:$0xff]
  %v81 = vld [vmem:[%s3 + $0x98] sm:$0xff]
  %v82 = vld [vmem:[%s3 + $0xa0] sm:$0xff]
  %v83 = vld [vmem:[%s3 + $0xa8] sm:$0xff]
  %v84 = vld [vmem:[%s3 + $0xb0] sm:$0xff]
  %v85 = vld [vmem:[%s3 + $0xb8] sm:$0xff]
  %v86 = vld [vmem:[%s3 + $0xc0] sm:$0xff]
  %v87 = vld [vmem:[%s3 + $0xc8] sm:$0xff]
  %v88 = vld [vmem:[%s3 + $0xd0] sm:$0xff]
  %v89 = vld [vmem:[%s3 + $0xd8] sm:$0xff]
  %v90 = vld [vmem:[%s3 + $0xe0] sm:$0xff]
  %v91 = vld [vmem:[%s3 + $0xe8] sm:$0xff]
  %v92 = vld [vmem:[%s4] sm:$0xff]
  %v93 = vld [vmem:[%s4 + $0x8] sm:$0xff]
  %v94 = vld [vmem:[%s4 + $0x10] sm:$0xff]
  %v95 = vld [vmem:[%s4 + $0x18] sm:$0xff]
  %v96 = vld [vmem:[%s4 + $0x20] sm:$0xff]
  %v97 = vld [vmem:[%s4 + $0x28] sm:$0xff]
  %v98 = vld [vmem:[%s4 + $0x30] sm:$0xff]
  %v99 = vld [vmem:[%s4 + $0x38] sm:$0xff]
  %v100 = vld [vmem:[%s4 + $0x40] sm:$0xff]
  %v101 = vld [vmem:[%s4 + $0x48] sm:$0xff]
  %v102 = vld [vmem:[%s4 + $0x50] sm:$0xff]
  %v103 = vld [vmem:[%s4 + $0x58] sm:$0xff]
  %v104 = vld [vmem:[%s4 + $0x60] sm:$0xff]
  %v105 = vld [vmem:[%s4 + $0x68] sm:$0xff]
  %v106 = vld [vmem:[%s4 + $0x70] sm:$0xff]
  %v107 = vld [vmem:[%s4 + $0x78] sm:$0xff]
  %v108 = vld [vmem:[%s4 + $0x80] sm:$0xff]
  %v109 = vld [vmem:[%s4 + $0x88] sm:$0xff]
  %v110 = vld [vmem:[%s4 + $0x90] sm:$0xff]
  %v111 = vld [vmem:[%s4 + $0x98] sm:$0xff]
  %v112 = vld [vmem:[%s4 + $0xa0] sm:$0xff]
  %v113 = vld [vmem:[%s4 + $0xa8] sm:$0xff]
  %v114 = vld [vmem:[%s4 + $0xb0] sm:$0xff]
  %v115 = vld [vmem:[%s4 + $0xb8] sm:$0xff]
  %v116 = vld [vmem:[%s4 + $0xc0] sm:$0xff]
  %v117 = vld [vmem:[%s4 + $0xc8] sm:$0xff]
  %v118 = vld [vmem:[%s4 + $0xd0] sm:$0xff]
  %v119 = vld [vmem:[%s4 + $0xd8] sm:$0xff]
  %v120 = vld [vmem:[%s4 + $0xe0] sm:$0xff]
  %v121 = vld [vmem:[%s4 + $0xe8] sm:$0xff]
  %v122 = vld [vmem:[%s4 + $0xf0] sm:$0xff]
  %v123 = vld [vmem:[%s4 + $0xf8] sm:$0xff]
  %v124 = vld [vmem:[%s4 + $0x100] sm:$0xff]
  %v125 = vld [vmem:[%s4 + $0x108] sm:$0xff]
  %v126 = vld [vmem:[%s4 + $0x110] sm:$0xff]
  %v127 = vld [vmem:[%s4 + $0x118] sm:$0xff]
  %v128 = vld [vmem:[%s4 + $0x120] sm:$0xff]
  %v129 = vld [vmem:[%s4 + $0x128] sm:$0xff]
  %v130 = vld [vmem:[%s4 + $0x130] sm:$0xff]
  %v131 = vld [vmem:[%s4 + $0x138] sm:$0xff]
  %v132 = vld [vmem:[%s4 + $0x140] sm:$0xff]
  %v133 = vld [vmem:[%s4 + $0x148] sm:$0xff]
  %v134 = vld [vmem:[%s4 + $0x150] sm:$0xff]
  %v135 = vld [vmem:[%s4 + $0x158] sm:$0xff]
  %v136 = vld [vmem:[%s4 + $0x160] sm:$0xff]
  %v137 = vld [vmem:[%s4 + $0x168] sm:$0xff]
  %v138 = vld [vmem:[%s4 + $0x170] sm:$0xff]
  %v139 = vld [vmem:[%s4 + $0x178] sm:$0xff]
  %v140 = vld [vmem:[%s4 + $0x180] sm:$0xff]
  %v141 = vld [vmem:[%s4 + $0x188] sm:$0xff]
  %v142 = vld [vmem:[%s4 + $0x190] sm:$0xff]
  %v143 = vld [vmem:[%s4 + $0x198] sm:$0xff]
  %v144 = vld [vmem:[%s4 + $0x1a0] sm:$0xff]
  %v145 = vld [vmem:[%s4 + $0x1a8] sm:$0xff]
  %v146 = vld [vmem:[%s4 + $0x1b0] sm:$0xff]
  %v147 = vld [vmem:[%s4 + $0x1b8] sm:$0xff]
  %v148 = vld [vmem:[%s4 + $0x1c0] sm:$0xff]
  %v149 = vld [vmem:[%s4 + $0x1c8] sm:$0xff]
  %v150 = vld [vmem:[%s4 + $0x1d0] sm:$0xff]
  %v151 = vld [vmem:[%s4 + $0x1d8] sm:$0xff]
  %v152 = vld [vmem:[%s4 + $0x1e0] sm:$0xff]
  %v153 = vld [vmem:[%s4 + $0x1e8] sm:$0xff]
  %v154 = vld [vmem:[%s4 + $0x1f0] sm:$0xff]
  %v155 = vld [vmem:[%s4 + $0x1f8] sm:$0xff]
  %v156 = vld [vmem:[%s4 + $0x200] sm:$0xff]
  %v157 = vld [vmem:[%s4 + $0x208] sm:$0xff]
  %v158 = vld [vmem:[%s4 + $0x210] sm:$0xff]
  %v159 = vld [vmem:[%s4 + $0x218] sm:$0xff]
  %v160 = vld [vmem:[%s4 + $0x220] sm:$0xff]
  %v161 = vld [vmem:[%s4 + $0x228] sm:$0xff]
  %v162 = vld [vmem:[%s4 + $0x230] sm:$0xff]
  %v163 = vld [vmem:[%s4 + $0x238] sm:$0xff]
  %v164 = vld [vmem:[%s4 + $0x240] sm:$0xff]
  %v165 = vld [vmem:[%s4 + $0x248] sm:$0xff]
  %v166 = vld [vmem:[%s4 + $0x250] sm:$0xff]
  %v167 = vld [vmem:[%s4 + $0x258] sm:$0xff]
  %v168 = vld [vmem:[%s4 + $0x260] sm:$0xff]
  %v169 = vld [vmem:[%s4 + $0x268] sm:$0xff]
  %v170 = vld [vmem:[%s4 + $0x270] sm:$0xff]
  %v171 = vld [vmem:[%s4 + $0x278] sm:$0xff]
  %v172 = vld [vmem:[%s4 + $0x280] sm:$0xff]
  %v173 = vld [vmem:[%s4 + $0x288] sm:$0xff]
  %v174 = vld [vmem:[%s4 + $0x290] sm:$0xff]
  %v175 = vld [vmem:[%s4 + $0x298] sm:$0xff]
  %v176 = vld [vmem:[%s4 + $0x2a0] sm:$0xff]
  %v177 = vld [vmem:[%s4 + $0x2a8] sm:$0xff]
  %v178 = vld [vmem:[%s4 + $0x2b0] sm:$0xff]
  %v179 = vld [vmem:[%s4 + $0x2b8] sm:$0xff]
  %v180 = vld [vmem:[%s4 + $0x2c0] sm:$0xff]
  %v181 = vld [vmem:[%s4 + $0x2c8] sm:$0xff]
  %v182 = vld [vmem:[%s4 + $0x2d0] sm:$0xff]
  %v183 = vld [vmem:[%s4 + $0x2d8] sm:$0xff]
  %v184 = vld [vmem:[%s4 + $0x2e0] sm:$0xff]
  %v185 = vld [vmem:[%s4 + $0x2e8] sm:$0xff]
  %v186 = vld [vmem:[%s4 + $0x2f0] sm:$0xff]
  %v187 = vld [vmem:[%s4 + $0x2f8] sm:$0xff]
  %v188 = vld [vmem:[%s4 + $0x300] sm:$0xff]
  %v189 = vld [vmem:[%s4 + $0x308] sm:$0xff]
  %v190 = vld [vmem:[%s4 + $0x310] sm:$0xff]
  %v191 = vld [vmem:[%s4 + $0x318] sm:$0xff]
  %v192 = vld [vmem:[%s4 + $0x320] sm:$0xff]
  %v193 = vld [vmem:[%s4 + $0x328] sm:$0xff]
  %v194 = vld [vmem:[%s4 + $0x330] sm:$0xff]
  %v195 = vld [vmem:[%s4 + $0x338] sm:$0xff]
  %v196 = vld [vmem:[%s4 + $0x340] sm:$0xff]
  %v197 = vld [vmem:[%s4 + $0x348] sm:$0xff]
  %v198 = vld [vmem:[%s4 + $0x350] sm:$0xff]
  %v199 = vld [vmem:[%s4 + $0x358] sm:$0xff]
  %v200 = vld [vmem:[%s4 + $0x360] sm:$0xff]
  %v201 = vld [vmem:[%s4 + $0x368] sm:$0xff]
  %v202 = vld [vmem:[%s4 + $0x370] sm:$0xff]
  %v203 = vld [vmem:[%s4 + $0x378] sm:$0xff]
  %v204 = vld [vmem:[%s4 + $0x380] sm:$0xff]
  %v205 = vld [vmem:[%s4 + $0x388] sm:$0xff]
  %v206 = vld [vmem:[%s4 + $0x390] sm:$0xff]
  %v207 = vld [vmem:[%s4 + $0x398] sm:$0xff]
  %v208 = vld [vmem:[%s4 + $0x3a0] sm:$0xff]
  %v209 = vld [vmem:[%s4 + $0x3a8] sm:$0xff]
  %v210 = vld [vmem:[%s4 + $0x3b0] sm:$0xff]
  %v211 = vld [vmem:[%s4 + $0x3b8] sm:$0xff]
  %v212 = vld [vmem:[%s4 + $0x3c0] sm:$0xff]
  %v213 = vld [vmem:[%s4 + $0x3c8] sm:$0xff]
  %v214 = vld [vmem:[%s4 + $0x3d0] sm:$0xff]
  %v215 = vld [vmem:[%s4 + $0x3d8] sm:$0xff]
  %v216 = vld [vmem:[%s4 + $0x3e0] sm:$0xff]
  %v217 = vld [vmem:[%s4 + $0x3e8] sm:$0xff]
  %v218 = vld [vmem:[%s4 + $0x3f0] sm:$0xff]
  %v219 = vld [vmem:[%s4 + $0x3f8] sm:$0xff]
  %v220 = vld [vmem:[%s4 + $0x400] sm:$0xff]
  %v221 = vld [vmem:[%s4 + $0x408] sm:$0xff]
  %v222 = vld [vmem:[%s4 + $0x410] sm:$0xff]
  %v223 = vld [vmem:[%s4 + $0x418] sm:$0xff]
  %v224 = vld [vmem:[%s4 + $0x420] sm:$0xff]
  %v225 = vld [vmem:[%s4 + $0x428] sm:$0xff]
  %v226 = vld [vmem:[%s4 + $0x430] sm:$0xff]
  %v227 = vld [vmem:[%s4 + $0x438] sm:$0xff]
  %v228 = vld [vmem:[%s4 + $0x440] sm:$0xff]
  %v229 = vld [vmem:[%s4 + $0x448] sm:$0xff]
  %v230 = vld [vmem:[%s4 + $0x450] sm:$0xff]
  %v231 = vld [vmem:[%s4 + $0x458] sm:$0xff]
  %v232 = vld [vmem:[%s4 + $0x460] sm:$0xff]
  %v233 = vld [vmem:[%s4 + $0x468] sm:$0xff]
  %v234 = vld [vmem:[%s4 + $0x470] sm:$0xff]
  %v235 = vld [vmem:[%s4 + $0x478] sm:$0xff]
  %v236 = vld [vmem:[%s4 + $0x480] sm:$0xff]
  %v237 = vld [vmem:[%s4 + $0x488] sm:$0xff]
  %v238 = vld [vmem:[%s4 + $0x490] sm:$0xff]
  %v239 = vld [vmem:[%s4 + $0x498] sm:$0xff]
  %v240 = vld [vmem:[%s4 + $0x4a0] sm:$0xff]
  %v241 = vld [vmem:[%s4 + $0x4a8] sm:$0xff]
  %v242 = vld [vmem:[%s4 + $0x4b0] sm:$0xff]
  %v243 = vld [vmem:[%s4 + $0x4b8] sm:$0xff]
  %v244 = vld [vmem:[%s4 + $0x4c0] sm:$0xff]
  %v245 = vld [vmem:[%s4 + $0x4c8] sm:$0xff]
  %v246 = vld [vmem:[%s4 + $0x4d0] sm:$0xff]
  %v247 = vld [vmem:[%s4 + $0x4d8] sm:$0xff]
  %v248 = vld [vmem:[%s4 + $0x4e0] sm:$0xff]
  %v249 = vld [vmem:[%s4 + $0x4e8] sm:$0xff]
  %v250 = vld [vmem:[%s4 + $0x4f0] sm:$0xff]
  %v251 = vld [vmem:[%s4 + $0x4f8] sm:$0xff]
  %v252 = vld [vmem:[%s4 + $0x500] sm:$0xff]
  %v253 = vld [vmem:[%s4 + $0x508] sm:$0xff]
  %v254 = vld [vmem:[%s4 + $0x510] sm:$0xff]
  %v255 = vld [vmem:[%s4 + $0x518] sm:$0xff]
  %v256 = vld [vmem:[%s4 + $0x520] sm:$0xff]
  %v257 = vld [vmem:[%s4 + $0x528] sm:$0xff]
  %v258 = vld [vmem:[%s4 + $0x530] sm:$0xff]
  %v259 = vld [vmem:[%s4 + $0x538] sm:$0xff]
  %v260 = vld [vmem:[%s4 + $0x540] sm:$0xff]
  %v261 = vld [vmem:[%s4 + $0x548] sm:$0xff]
  %v262 = vld [vmem:[%s4 + $0x550] sm:$0xff]
  %v263 = vld [vmem:[%s4 + $0x558] sm:$0xff]
  %v264 = vld [vmem:[%s4 + $0x560] sm:$0xff]
  %v265 = vld [vmem:[%s4 + $0x568] sm:$0xff]
  %v266 = vld [vmem:[%s4 + $0x570] sm:$0xff]
  %v267 = vld [vmem:[%s4 + $0x578] sm:$0xff]
  %v268 = vld [vmem:[%s4 + $0x580] sm:$0xff]
  %v269 = vld [vmem:[%s4 + $0x588] sm:$0xff]
  %v270 = vld [vmem:[%s4 + $0x590] sm:$0xff]
  %v271 = vld [vmem:[%s4 + $0x598] sm:$0xff]
  %v272 = vld [vmem:[%s4 + $0x5a0] sm:$0xff]
  %v273 = vld [vmem:[%s4 + $0x5a8] sm:$0xff]
  %v274 = vld [vmem:[%s4 + $0x5b0] sm:$0xff]
  %v275 = vld [vmem:[%s4 + $0x5b8] sm:$0xff]
  %v276 = vld [vmem:[%s4 + $0x5c0] sm:$0xff]
  %v277 = vld [vmem:[%s4 + $0x5c8] sm:$0xff]
  %v278 = vld [vmem:[%s4 + $0x5d0] sm:$0xff]
  %v279 = vld [vmem:[%s4 + $0x5d8] sm:$0xff]
  %v280 = vld [vmem:[%s4 + $0x5e0] sm:$0xff]
  %v281 = vld [vmem:[%s4 + $0x5e8] sm:$0xff]
  %v282 = vld [vmem:[%s4 + $0x5f0] sm:$0xff]
  %v283 = vld [vmem:[%s4 + $0x5f8] sm:$0xff]
  %v284 = vld [vmem:[%s4 + $0x600] sm:$0xff]
  %v285 = vld [vmem:[%s4 + $0x608] sm:$0xff]
  %v286 = vld [vmem:[%s4 + $0x610] sm:$0xff]
  %v287 = vld [vmem:[%s4 + $0x618] sm:$0xff]
  %v288 = vld [vmem:[%s4 + $0x620] sm:$0xff]
  %v289 = vld [vmem:[%s4 + $0x628] sm:$0xff]
  %v290 = vld [vmem:[%s4 + $0x630] sm:$0xff]
  %v291 = vld [vmem:[%s4 + $0x638] sm:$0xff]
  %v292 = vld [vmem:[%s4 + $0x640] sm:$0xff]
  %v293 = vld [vmem:[%s4 + $0x648] sm:$0xff]
  %v294 = vld [vmem:[%s4 + $0x650] sm:$0xff]
  %v295 = vld [vmem:[%s4 + $0x658] sm:$0xff]
  %v296 = vld [vmem:[%s4 + $0x660] sm:$0xff]
  %v297 = vld [vmem:[%s4 + $0x668] sm:$0xff]
  %v298 = vld [vmem:[%s4 + $0x670] sm:$0xff]
  %v299 = vld [vmem:[%s4 + $0x678] sm:$0xff]
  %v300 = vld [vmem:[%s4 + $0x680] sm:$0xff]
  %v301 = vld [vmem:[%s4 + $0x688] sm:$0xff]
  %v302 = vld [vmem:[%s4 + $0x690] sm:$0xff]
  %v303 = vld [vmem:[%s4 + $0x698] sm:$0xff]
  %v304 = vld [vmem:[%s4 + $0x6a0] sm:$0xff]
  %v305 = vld [vmem:[%s4 + $0x6a8] sm:$0xff]
  %v306 = vld [vmem:[%s4 + $0x6b0] sm:$0xff]
  %v307 = vld [vmem:[%s4 + $0x6b8] sm:$0xff]
  %v308 = vld [vmem:[%s4 + $0x6c0] sm:$0xff]
  %v309 = vld [vmem:[%s4 + $0x6c8] sm:$0xff]
  %v310 = vld [vmem:[%s4 + $0x6d0] sm:$0xff]
  %v311 = vld [vmem:[%s4 + $0x6d8] sm:$0xff]
  %v312 = vld [vmem:[%s4 + $0x6e0] sm:$0xff]
  %v313 = vld [vmem:[%s4 + $0x6e8] sm:$0xff]
  %v314 = vld [vmem:[%s4 + $0x6f0] sm:$0xff]
  %v315 = vld [vmem:[%s4 + $0x6f8] sm:$0xff]
  %v316 = vld [vmem:[%s4 + $0x700] sm:$0xff]
  %v317 = vld [vmem:[%s4 + $0x708] sm:$0xff]
  %v318 = vld [vmem:[%s4 + $0x710] sm:$0xff]
  %v319 = vld [vmem:[%s4 + $0x718] sm:$0xff]
  %v320 = vld [vmem:[%s4 + $0x720] sm:$0xff]
  %v321 = vld [vmem:[%s4 + $0x728] sm:$0xff]
  %v322 = vld [vmem:[%s4 + $0x730] sm:$0xff]
  %v323 = vld [vmem:[%s4 + $0x738] sm:$0xff]
  %v324 = vld [vmem:[%s4 + $0x740] sm:$0xff]
  %v325 = vld [vmem:[%s4 + $0x748] sm:$0xff]
  %v326 = vld [vmem:[%s4 + $0x750] sm:$0xff]
  %v327 = vld [vmem:[%s4 + $0x758] sm:$0xff]
  %v328 = vld [vmem:[%s4 + $0x760] sm:$0xff]
  %v329 = vld [vmem:[%s4 + $0x768] sm:$0xff]
  %v330 = vld [vmem:[%s4 + $0x770] sm:$0xff]
  %v331 = vld [vmem:[%s4 + $0x778] sm:$0xff]
  %v332 = vld [vmem:[%s4 + $0x780] sm:$0xff]
  %v333 = vld [vmem:[%s4 + $0x788] sm:$0xff]
  %v334 = vld [vmem:[%s4 + $0x790] sm:$0xff]
  %v335 = vld [vmem:[%s4 + $0x798] sm:$0xff]
  %v336 = vld [vmem:[%s4 + $0x7a0] sm:$0xff]
  %v337 = vld [vmem:[%s4 + $0x7a8] sm:$0xff]
  %v338 = vld [vmem:[%s4 + $0x7b0] sm:$0xff]
  %v339 = vld [vmem:[%s4 + $0x7b8] sm:$0xff]
  %v340 = vld [vmem:[%s4 + $0x7c0] sm:$0xff]
  %v341 = vld [vmem:[%s4 + $0x7c8] sm:$0xff]
  %v342 = vld [vmem:[%s4 + $0x7d0] sm:$0xff]
  %v343 = vld [vmem:[%s4 + $0x7d8] sm:$0xff]
  %v344 = vld [vmem:[%s4 + $0x7e0] sm:$0xff]
  %v345 = vld [vmem:[%s4 + $0x7e8] sm:$0xff]
  %v346 = vld [vmem:[%s4 + $0x7f0] sm:$0xff]
  %v347 = vld [vmem:[%s4 + $0x7f8] sm:$0xff]
  %v348 = vld [vmem:[%s4 + $0x800] sm:$0xff]
  %v349 = vld [vmem:[%s4 + $0x808] sm:$0xff]
  %v350 = vld [vmem:[%s4 + $0x810] sm:$0xff]
  %v351 = vld [vmem:[%s4 + $0x818] sm:$0xff]
  %v352 = vld [vmem:[%s4 + $0x820] sm:$0xff]
  %v353 = vld [vmem:[%s4 + $0x828] sm:$0xff]
  %v354 = vld [vmem:[%s4 + $0x830] sm:$0xff]
  %v355 = vld [vmem:[%s4 + $0x838] sm:$0xff]
  %v356 = vld [vmem:[%s4 + $0x840] sm:$0xff]
  %v357 = vld [vmem:[%s4 + $0x848] sm:$0xff]
  %v358 = vld [vmem:[%s4 + $0x850] sm:$0xff]
  %v359 = vld [vmem:[%s4 + $0x858] sm:$0xff]
  %v360 = vld [vmem:[%s4 + $0x860] sm:$0xff]
  %v361 = vld [vmem:[%s4 + $0x868] sm:$0xff]
  %v362 = vld [vmem:[%s4 + $0x870] sm:$0xff]
  %v363 = vld [vmem:[%s4 + $0x878] sm:$0xff]
  %v364 = vld [vmem:[%s4 + $0x880] sm:$0xff]
  %v365 = vld [vmem:[%s4 + $0x888] sm:$0xff]
  %v366 = vld [vmem:[%s4 + $0x890] sm:$0xff]
  %v367 = vld [vmem:[%s4 + $0x898] sm:$0xff]
  %v368 = vld [vmem:[%s4 + $0x8a0] sm:$0xff]
  %v369 = vld [vmem:[%s4 + $0x8a8] sm:$0xff]
  %v370 = vld [vmem:[%s4 + $0x8b0] sm:$0xff]
  %v371 = vld [vmem:[%s4 + $0x8b8] sm:$0xff]
  %v372 = vld [vmem:[%s4 + $0x8c0] sm:$0xff]
  %v373 = vld [vmem:[%s4 + $0x8c8] sm:$0xff]
  %v374 = vld [vmem:[%s4 + $0x8d0] sm:$0xff]
  %v375 = vld [vmem:[%s4 + $0x8d8] sm:$0xff]
  %v376 = vld [vmem:[%s4 + $0x8e0] sm:$0xff]
  %v377 = vld [vmem:[%s4 + $0x8e8] sm:$0xff]
  %v378 = vld [vmem:[%s4 + $0x8f0] sm:$0xff]
  %v379 = vld [vmem:[%s4 + $0x8f8] sm:$0xff]
  %v380 = vld [vmem:[%s5] sm:$0xf]
  %v382 = vperm.slane %v380, 0
  %v383 = vperm.slane %v380, 1
  %v384 = vperm.slane %v380, 2
  %v385 = vperm.slane %v380, 3
  %vm390 = vcmask 523264
  %v392 = vsel %vm390, %v66, 0
  %v395 = vsel %vm390, %v71, 0
  %v398 = vsel %vm390, %v76, 0
  %v401 = vsel %vm390, %v81, 0
  %v404 = vsel %vm390, %v86, 0
  %v407 = vsel %vm390, %v91, 0
  %409 = vmatpush.msra.mxu0 %v152
  %410 = vmatpush.msra.mxu0 %v148
  %411 = vmatpush.msra.mxu0 %v144
  %412 = vmatpush.msra.mxu0 %v140
  %413 = vmatpush.msra.mxu0 %v136
  %414 = vmatpush.msra.mxu0 %v132
  %415 = vmatpush.msra.mxu0 %v128
  %416 = vmatpush.msra.mxu0 %v124
  %417 = vmatpush.msra.mxu0 %v120
  %418 = vmatpush.msra.mxu0 %v116
  %419 = vmatpush.msra.mxu0 %v112
  %420 = vmatpush.msra.mxu0 %v108
  %421 = vmatpush.msra.mxu0 %v104
  %422 = vmatpush.msra.mxu0 %v100
  %423 = vmatpush.msra.mxu0 %v96
  %424 = vmatpush.msra.mxu0 %v92
  %425 = vmatmul.f32.gmra.mxu0 %v62
  %v426 = vpop.f32.mrf.mxu0
  %v427 = vadd.f32 %v382, %v426
  %428 = vmatmul.f32.gmra.mxu0 %v67
  %v429 = vpop.f32.mrf.mxu0
  %v430 = vadd.f32 %v382, %v429
  %431 = vmatmul.f32.gmra.mxu0 %v72
  %v432 = vpop.f32.mrf.mxu0
  %v433 = vadd.f32 %v382, %v432
  %434 = vmatmul.f32.gmra.mxu0 %v77
  %v435 = vpop.f32.mrf.mxu0
  %v436 = vadd.f32 %v382, %v435
  %437 = vmatmul.f32.gmra.mxu0 %v82
  %v438 = vpop.f32.mrf.mxu0
  %v439 = vadd.f32 %v382, %v438
  %440 = vmatmul.f32.gmra.mxu0 %v87
  %v441 = vpop.f32.mrf.mxu0
  %v442 = vadd.f32 %v382, %v441
  %443 = vdwg.mxu0
  %444 = vmatpush.msra.mxu0 %v216
  %445 = vmatpush.msra.mxu0 %v212
  %446 = vmatpush.msra.mxu0 %v208
  %447 = vmatpush.msra.mxu0 %v204
  %448 = vmatpush.msra.mxu0 %v200
  %449 = vmatpush.msra.mxu0 %v196
  %450 = vmatpush.msra.mxu0 %v192
  %451 = vmatpush.msra.mxu0 %v188
  %452 = vmatpush.msra.mxu0 %v184
  %453 = vmatpush.msra.mxu0 %v180
  %454 = vmatpush.msra.mxu0 %v176
  %455 = vmatpush.msra.mxu0 %v172
  %456 = vmatpush.msra.mxu0 %v168
  %457 = vmatpush.msra.mxu0 %v164
  %458 = vmatpush.msra.mxu0 %v160
  %459 = vmatpush.msra.mxu0 %v156
  %460 = vmatmul.f32.gmra.mxu0 %v63
  %v461 = vpop.f32.mrf.mxu0
  %v462 = vadd.f32 %v427, %v461
  %463 = vmatmul.f32.gmra.mxu0 %v68
  %v464 = vpop.f32.mrf.mxu0
  %v465 = vadd.f32 %v430, %v464
  %466 = vmatmul.f32.gmra.mxu0 %v73
  %v467 = vpop.f32.mrf.mxu0
  %v468 = vadd.f32 %v433, %v467
  %469 = vmatmul.f32.gmra.mxu0 %v78
  %v470 = vpop.f32.mrf.mxu0
  %v471 = vadd.f32 %v436, %v470
  %472 = vmatmul.f32.gmra.mxu0 %v83
  %v473 = vpop.f32.mrf.mxu0
  %v474 = vadd.f32 %v439, %v473
  %475 = vmatmul.f32.gmra.mxu0 %v88
  %v476 = vpop.f32.mrf.mxu0
  %v477 = vadd.f32 %v442, %v476
  %478 = vdwg.mxu0
  %479 = vmatpush.msra.mxu0 %v280
  %480 = vmatpush.msra.mxu0 %v276
  %481 = vmatpush.msra.mxu0 %v272
  %482 = vmatpush.msra.mxu0 %v268
  %483 = vmatpush.msra.mxu0 %v264
  %484 = vmatpush.msra.mxu0 %v260
  %485 = vmatpush.msra.mxu0 %v256
  %486 = vmatpush.msra.mxu0 %v252
  %487 = vmatpush.msra.mxu0 %v248
  %488 = vmatpush.msra.mxu0 %v244
  %489 = vmatpush.msra.mxu0 %v240
  %490 = vmatpush.msra.mxu0 %v236
  %491 = vmatpush.msra.mxu0 %v232
  %492 = vmatpush.msra.mxu0 %v228
  %493 = vmatpush.msra.mxu0 %v224
  %494 = vmatpush.msra.mxu0 %v220
  %495 = vmatmul.f32.gmra.mxu0 %v64
  %v496 = vpop.f32.mrf.mxu0
  %v497 = vadd.f32 %v462, %v496
  %498 = vmatmul.f32.gmra.mxu0 %v69
  %v499 = vpop.f32.mrf.mxu0
  %v500 = vadd.f32 %v465, %v499
  %501 = vmatmul.f32.gmra.mxu0 %v74
  %v502 = vpop.f32.mrf.mxu0
  %v503 = vadd.f32 %v468, %v502
  %504 = vmatmul.f32.gmra.mxu0 %v79
  %v505 = vpop.f32.mrf.mxu0
  %v506 = vadd.f32 %v471, %v505
  %507 = vmatmul.f32.gmra.mxu0 %v84
  %v508 = vpop.f32.mrf.mxu0
  %v509 = vadd.f32 %v474, %v508
  %510 = vmatmul.f32.gmra.mxu0 %v89
  %v511 = vpop.f32.mrf.mxu0
  %v512 = vadd.f32 %v477, %v511
  %513 = vdwg.mxu0
  %514 = vmatpush.msra.mxu0 %v344
  %515 = vmatpush.msra.mxu0 %v340
  %516 = vmatpush.msra.mxu0 %v336
  %517 = vmatpush.msra.mxu0 %v332
  %518 = vmatpush.msra.mxu0 %v328
  %519 = vmatpush.msra.mxu0 %v324
  %520 = vmatpush.msra.mxu0 %v320
  %521 = vmatpush.msra.mxu0 %v316
  %522 = vmatpush.msra.mxu0 %v312
  %523 = vmatpush.msra.mxu0 %v308
  %524 = vmatpush.msra.mxu0 %v304
  %525 = vmatpush.msra.mxu0 %v300
  %526 = vmatpush.msra.mxu0 %v296
  %527 = vmatpush.msra.mxu0 %v292
  %528 = vmatpush.msra.mxu0 %v288
  %529 = vmatpush.msra.mxu0 %v284
  %530 = vmatmul.f32.gmra.mxu0 %v65
  %v531 = vpop.f32.mrf.mxu0
  %v532 = vadd.f32 %v497, %v531
  %533 = vmatmul.f32.gmra.mxu0 %v70
  %v534 = vpop.f32.mrf.mxu0
  %v535 = vadd.f32 %v500, %v534
  %536 = vmatmul.f32.gmra.mxu0 %v75
  %v537 = vpop.f32.mrf.mxu0
  %v538 = vadd.f32 %v503, %v537
  %539 = vmatmul.f32.gmra.mxu0 %v80
  %v540 = vpop.f32.mrf.mxu0
  %v541 = vadd.f32 %v506, %v540
  %542 = vmatmul.f32.gmra.mxu0 %v85
  %v543 = vpop.f32.mrf.mxu0
  %v544 = vadd.f32 %v509, %v543
  %545 = vmatmul.f32.gmra.mxu0 %v90
  %v546 = vpop.f32.mrf.mxu0
  %v547 = vadd.f32 %v512, %v546
  %548 = vdwg.mxu0
  %549 = vmatpush.msra.mxu0 0.0
  %550 = vmatpush.msra.mxu0 0.0
  %551 = vmatpush.msra.mxu0 0.0
  %552 = vmatpush.msra.mxu0 0.0
  %553 = vmatpush.msra.mxu0 0.0
  %554 = vmatpush.msra.mxu0 0.0
  %555 = vmatpush.msra.mxu0 0.0
  %556 = vmatpush.msra.mxu0 0.0
  %557 = vmatpush.msra.mxu0 %v376
  %558 = vmatpush.msra.mxu0 %v372
  %559 = vmatpush.msra.mxu0 %v368
  %560 = vmatpush.msra.mxu0 %v364
  %561 = vmatpush.msra.mxu0 %v360
  %562 = vmatpush.msra.mxu0 %v356
  %563 = vmatpush.msra.mxu0 %v352
  %564 = vmatpush.msra.mxu0 %v348
  %565 = vmatmul.f32.gmra.mxu0 %v392
  %v566 = vpop.f32.mrf.mxu0
  %v567 = vadd.f32 %v532, %v566
  %568 = vmatmul.f32.gmra.mxu0 %v395
  %v569 = vpop.f32.mrf.mxu0
  %v570 = vadd.f32 %v535, %v569
  %571 = vmatmul.f32.gmra.mxu0 %v398
  %v572 = vpop.f32.mrf.mxu0
  %v573 = vadd.f32 %v538, %v572
  %574 = vmatmul.f32.gmra.mxu0 %v401
  %v575 = vpop.f32.mrf.mxu0
  %v576 = vadd.f32 %v541, %v575
  %577 = vmatmul.f32.gmra.mxu0 %v404
  %v578 = vpop.f32.mrf.mxu0
  %v579 = vadd.f32 %v544, %v578
  %580 = vmatmul.f32.gmra.mxu0 %v407
  %v581 = vpop.f32.mrf.mxu0
  %v582 = vadd.f32 %v547, %v581
  %583 = vdwg.mxu0
  %584 = vmatpush.msra.mxu0 %v153
  %585 = vmatpush.msra.mxu0 %v149
  %586 = vmatpush.msra.mxu0 %v145
  %587 = vmatpush.msra.mxu0 %v141
  %588 = vmatpush.msra.mxu0 %v137
  %589 = vmatpush.msra.mxu0 %v133
  %590 = vmatpush.msra.mxu0 %v129
  %591 = vmatpush.msra.mxu0 %v125
  %592 = vmatpush.msra.mxu0 %v121
  %593 = vmatpush.msra.mxu0 %v117
  %594 = vmatpush.msra.mxu0 %v113
  %595 = vmatpush.msra.mxu0 %v109
  %596 = vmatpush.msra.mxu0 %v105
  %597 = vmatpush.msra.mxu0 %v101
  %598 = vmatpush.msra.mxu0 %v97
  %599 = vmatpush.msra.mxu0 %v93
  %600 = vmatmul.f32.gmra.mxu0 %v62
  %v601 = vpop.f32.mrf.mxu0
  %v602 = vadd.f32 %v383, %v601
  %603 = vmatmul.f32.gmra.mxu0 %v67
  %v604 = vpop.f32.mrf.mxu0
  %v605 = vadd.f32 %v383, %v604
  %606 = vmatmul.f32.gmra.mxu0 %v72
  %v607 = vpop.f32.mrf.mxu0
  %v608 = vadd.f32 %v383, %v607
  %609 = vmatmul.f32.gmra.mxu0 %v77
  %v610 = vpop.f32.mrf.mxu0
  %v611 = vadd.f32 %v383, %v610
  %612 = vmatmul.f32.gmra.mxu0 %v82
  %v613 = vpop.f32.mrf.mxu0
  %v614 = vadd.f32 %v383, %v613
  %615 = vmatmul.f32.gmra.mxu0 %v87
  %v616 = vpop.f32.mrf.mxu0
  %v617 = vadd.f32 %v383, %v616
  %618 = vdwg.mxu0
  %619 = vmatpush.msra.mxu0 %v217
  %620 = vmatpush.msra.mxu0 %v213
  %621 = vmatpush.msra.mxu0 %v209
  %622 = vmatpush.msra.mxu0 %v205
  %623 = vmatpush.msra.mxu0 %v201
  %624 = vmatpush.msra.mxu0 %v197
  %625 = vmatpush.msra.mxu0 %v193
  %626 = vmatpush.msra.mxu0 %v189
  %627 = vmatpush.msra.mxu0 %v185
  %628 = vmatpush.msra.mxu0 %v181
  %629 = vmatpush.msra.mxu0 %v177
  %630 = vmatpush.msra.mxu0 %v173
  %631 = vmatpush.msra.mxu0 %v169
  %632 = vmatpush.msra.mxu0 %v165
  %633 = vmatpush.msra.mxu0 %v161
  %634 = vmatpush.msra.mxu0 %v157
  %635 = vmatmul.f32.gmra.mxu0 %v63
  %v636 = vpop.f32.mrf.mxu0
  %v637 = vadd.f32 %v602, %v636
  %638 = vmatmul.f32.gmra.mxu0 %v68
  %v639 = vpop.f32.mrf.mxu0
  %v640 = vadd.f32 %v605, %v639
  %641 = vmatmul.f32.gmra.mxu0 %v73
  %v642 = vpop.f32.mrf.mxu0
  %v643 = vadd.f32 %v608, %v642
  %644 = vmatmul.f32.gmra.mxu0 %v78
  %v645 = vpop.f32.mrf.mxu0
  %v646 = vadd.f32 %v611, %v645
  %647 = vmatmul.f32.gmra.mxu0 %v83
  %v648 = vpop.f32.mrf.mxu0
  %v649 = vadd.f32 %v614, %v648
  %650 = vmatmul.f32.gmra.mxu0 %v88
  %v651 = vpop.f32.mrf.mxu0
  %v652 = vadd.f32 %v617, %v651
  %653 = vdwg.mxu0
  %654 = vmatpush.msra.mxu0 %v281
  %655 = vmatpush.msra.mxu0 %v277
  %656 = vmatpush.msra.mxu0 %v273
  %657 = vmatpush.msra.mxu0 %v269
  %658 = vmatpush.msra.mxu0 %v265
  %659 = vmatpush.msra.mxu0 %v261
  %660 = vmatpush.msra.mxu0 %v257
  %661 = vmatpush.msra.mxu0 %v253
  %662 = vmatpush.msra.mxu0 %v249
  %663 = vmatpush.msra.mxu0 %v245
  %664 = vmatpush.msra.mxu0 %v241
  %665 = vmatpush.msra.mxu0 %v237
  %666 = vmatpush.msra.mxu0 %v233
  %667 = vmatpush.msra.mxu0 %v229
  %668 = vmatpush.msra.mxu0 %v225
  %669 = vmatpush.msra.mxu0 %v221
  %670 = vmatmul.f32.gmra.mxu0 %v64
  %v671 = vpop.f32.mrf.mxu0
  %v672 = vadd.f32 %v637, %v671
  %673 = vmatmul.f32.gmra.mxu0 %v69
  %v674 = vpop.f32.mrf.mxu0
  %v675 = vadd.f32 %v640, %v674
  %676 = vmatmul.f32.gmra.mxu0 %v74
  %v677 = vpop.f32.mrf.mxu0
  %v678 = vadd.f32 %v643, %v677
  %679 = vmatmul.f32.gmra.mxu0 %v79
  %v680 = vpop.f32.mrf.mxu0
  %v681 = vadd.f32 %v646, %v680
  %682 = vmatmul.f32.gmra.mxu0 %v84
  %v683 = vpop.f32.mrf.mxu0
  %v684 = vadd.f32 %v649, %v683
  %685 = vmatmul.f32.gmra.mxu0 %v89
  %v686 = vpop.f32.mrf.mxu0
  %v687 = vadd.f32 %v652, %v686
  %688 = vdwg.mxu0
  %689 = vmatpush.msra.mxu0 %v345
  %690 = vmatpush.msra.mxu0 %v341
  %691 = vmatpush.msra.mxu0 %v337
  %692 = vmatpush.msra.mxu0 %v333
  %693 = vmatpush.msra.mxu0 %v329
  %694 = vmatpush.msra.mxu0 %v325
  %695 = vmatpush.msra.mxu0 %v321
  %696 = vmatpush.msra.mxu0 %v317
  %697 = vmatpush.msra.mxu0 %v313
  %698 = vmatpush.msra.mxu0 %v309
  %699 = vmatpush.msra.mxu0 %v305
  %700 = vmatpush.msra.mxu0 %v301
  %701 = vmatpush.msra.mxu0 %v297
  %702 = vmatpush.msra.mxu0 %v293
  %703 = vmatpush.msra.mxu0 %v289
  %704 = vmatpush.msra.mxu0 %v285
  %705 = vmatmul.f32.gmra.mxu0 %v65
  %v706 = vpop.f32.mrf.mxu0
  %v707 = vadd.f32 %v672, %v706
  %708 = vmatmul.f32.gmra.mxu0 %v70
  %v709 = vpop.f32.mrf.mxu0
  %v710 = vadd.f32 %v675, %v709
  %711 = vmatmul.f32.gmra.mxu0 %v75
  %v712 = vpop.f32.mrf.mxu0
  %v713 = vadd.f32 %v678, %v712
  %714 = vmatmul.f32.gmra.mxu0 %v80
  %v715 = vpop.f32.mrf.mxu0
  %v716 = vadd.f32 %v681, %v715
  %717 = vmatmul.f32.gmra.mxu0 %v85
  %v718 = vpop.f32.mrf.mxu0
  %v719 = vadd.f32 %v684, %v718
  %720 = vmatmul.f32.gmra.mxu0 %v90
  %v721 = vpop.f32.mrf.mxu0
  %v722 = vadd.f32 %v687, %v721
  %723 = vdwg.mxu0
  %724 = vmatpush.msra.mxu0 0.0
  %725 = vmatpush.msra.mxu0 0.0
  %726 = vmatpush.msra.mxu0 0.0
  %727 = vmatpush.msra.mxu0 0.0
  %728 = vmatpush.msra.mxu0 0.0
  %729 = vmatpush.msra.mxu0 0.0
  %730 = vmatpush.msra.mxu0 0.0
  %731 = vmatpush.msra.mxu0 0.0
  %732 = vmatpush.msra.mxu0 %v377
  %733 = vmatpush.msra.mxu0 %v373
  %734 = vmatpush.msra.mxu0 %v369
  %735 = vmatpush.msra.mxu0 %v365
  %736 = vmatpush.msra.mxu0 %v361
  %737 = vmatpush.msra.mxu0 %v357
  %738 = vmatpush.msra.mxu0 %v353
  %739 = vmatpush.msra.mxu0 %v349
  %740 = vmatmul.f32.gmra.mxu0 %v392
  %v741 = vpop.f32.mrf.mxu0
  %v742 = vadd.f32 %v707, %v741
  %743 = vmatmul.f32.gmra.mxu0 %v395
  %v744 = vpop.f32.mrf.mxu0
  %v745 = vadd.f32 %v710, %v744
  %746 = vmatmul.f32.gmra.mxu0 %v398
  %v747 = vpop.f32.mrf.mxu0
  %v748 = vadd.f32 %v713, %v747
  %749 = vmatmul.f32.gmra.mxu0 %v401
  %v750 = vpop.f32.mrf.mxu0
  %v751 = vadd.f32 %v716, %v750
  %752 = vmatmul.f32.gmra.mxu0 %v404
  %v753 = vpop.f32.mrf.mxu0
  %v754 = vadd.f32 %v719, %v753
  %755 = vmatmul.f32.gmra.mxu0 %v407
  %v756 = vpop.f32.mrf.mxu0
  %v757 = vadd.f32 %v722, %v756
  %758 = vdwg.mxu0
  %759 = vmatpush.msra.mxu0 %v154
  %760 = vmatpush.msra.mxu0 %v150
  %761 = vmatpush.msra.mxu0 %v146
  %762 = vmatpush.msra.mxu0 %v142
  %763 = vmatpush.msra.mxu0 %v138
  %764 = vmatpush.msra.mxu0 %v134
  %765 = vmatpush.msra.mxu0 %v130
  %766 = vmatpush.msra.mxu0 %v126
  %767 = vmatpush.msra.mxu0 %v122
  %768 = vmatpush.msra.mxu0 %v118
  %769 = vmatpush.msra.mxu0 %v114
  %770 = vmatpush.msra.mxu0 %v110
  %771 = vmatpush.msra.mxu0 %v106
  %772 = vmatpush.msra.mxu0 %v102
  %773 = vmatpush.msra.mxu0 %v98
  %774 = vmatpush.msra.mxu0 %v94
  %775 = vmatmul.f32.gmra.mxu0 %v62
  %v776 = vpop.f32.mrf.mxu0
  %v777 = vadd.f32 %v384, %v776
  %778 = vmatmul.f32.gmra.mxu0 %v67
  %v779 = vpop.f32.mrf.mxu0
  %v780 = vadd.f32 %v384, %v779
  %781 = vmatmul.f32.gmra.mxu0 %v72
  %v782 = vpop.f32.mrf.mxu0
  %v783 = vadd.f32 %v384, %v782
  %784 = vmatmul.f32.gmra.mxu0 %v77
  %v785 = vpop.f32.mrf.mxu0
  %v786 = vadd.f32 %v384, %v785
  %787 = vmatmul.f32.gmra.mxu0 %v82
  %v788 = vpop.f32.mrf.mxu0
  %v789 = vadd.f32 %v384, %v788
  %790 = vmatmul.f32.gmra.mxu0 %v87
  %v791 = vpop.f32.mrf.mxu0
  %v792 = vadd.f32 %v384, %v791
  %793 = vdwg.mxu0
  %794 = vmatpush.msra.mxu0 %v218
  %795 = vmatpush.msra.mxu0 %v214
  %796 = vmatpush.msra.mxu0 %v210
  %797 = vmatpush.msra.mxu0 %v206
  %798 = vmatpush.msra.mxu0 %v202
  %799 = vmatpush.msra.mxu0 %v198
  %800 = vmatpush.msra.mxu0 %v194
  %801 = vmatpush.msra.mxu0 %v190
  %802 = vmatpush.msra.mxu0 %v186
  %803 = vmatpush.msra.mxu0 %v182
  %804 = vmatpush.msra.mxu0 %v178
  %805 = vmatpush.msra.mxu0 %v174
  %806 = vmatpush.msra.mxu0 %v170
  %807 = vmatpush.msra.mxu0 %v166
  %808 = vmatpush.msra.mxu0 %v162
  %809 = vmatpush.msra.mxu0 %v158
  %810 = vmatmul.f32.gmra.mxu0 %v63
  %v811 = vpop.f32.mrf.mxu0
  %v812 = vadd.f32 %v777, %v811
  %813 = vmatmul.f32.gmra.mxu0 %v68
  %v814 = vpop.f32.mrf.mxu0
  %v815 = vadd.f32 %v780, %v814
  %816 = vmatmul.f32.gmra.mxu0 %v73
  %v817 = vpop.f32.mrf.mxu0
  %v818 = vadd.f32 %v783, %v817
  %819 = vmatmul.f32.gmra.mxu0 %v78
  %v820 = vpop.f32.mrf.mxu0
  %v821 = vadd.f32 %v786, %v820
  %822 = vmatmul.f32.gmra.mxu0 %v83
  %v823 = vpop.f32.mrf.mxu0
  %v824 = vadd.f32 %v789, %v823
  %825 = vmatmul.f32.gmra.mxu0 %v88
  %v826 = vpop.f32.mrf.mxu0
  %v827 = vadd.f32 %v792, %v826
  %828 = vdwg.mxu0
  %829 = vmatpush.msra.mxu0 %v282
  %830 = vmatpush.msra.mxu0 %v278
  %831 = vmatpush.msra.mxu0 %v274
  %832 = vmatpush.msra.mxu0 %v270
  %833 = vmatpush.msra.mxu0 %v266
  %834 = vmatpush.msra.mxu0 %v262
  %835 = vmatpush.msra.mxu0 %v258
  %836 = vmatpush.msra.mxu0 %v254
  %837 = vmatpush.msra.mxu0 %v250
  %838 = vmatpush.msra.mxu0 %v246
  %839 = vmatpush.msra.mxu0 %v242
  %840 = vmatpush.msra.mxu0 %v238
  %841 = vmatpush.msra.mxu0 %v234
  %842 = vmatpush.msra.mxu0 %v230
  %843 = vmatpush.msra.mxu0 %v226
  %844 = vmatpush.msra.mxu0 %v222
  %845 = vmatmul.f32.gmra.mxu0 %v64
  %v846 = vpop.f32.mrf.mxu0
  %v847 = vadd.f32 %v812, %v846
  %848 = vmatmul.f32.gmra.mxu0 %v69
  %v849 = vpop.f32.mrf.mxu0
  %v850 = vadd.f32 %v815, %v849
  %851 = vmatmul.f32.gmra.mxu0 %v74
  %v852 = vpop.f32.mrf.mxu0
  %v853 = vadd.f32 %v818, %v852
  %854 = vmatmul.f32.gmra.mxu0 %v79
  %v855 = vpop.f32.mrf.mxu0
  %v856 = vadd.f32 %v821, %v855
  %857 = vmatmul.f32.gmra.mxu0 %v84
  %v858 = vpop.f32.mrf.mxu0
  %v859 = vadd.f32 %v824, %v858
  %860 = vmatmul.f32.gmra.mxu0 %v89
  %v861 = vpop.f32.mrf.mxu0
  %v862 = vadd.f32 %v827, %v861
  %863 = vdwg.mxu0
  %864 = vmatpush.msra.mxu0 %v346
  %865 = vmatpush.msra.mxu0 %v342
  %866 = vmatpush.msra.mxu0 %v338
  %867 = vmatpush.msra.mxu0 %v334
  %868 = vmatpush.msra.mxu0 %v330
  %869 = vmatpush.msra.mxu0 %v326
  %870 = vmatpush.msra.mxu0 %v322
  %871 = vmatpush.msra.mxu0 %v318
  %872 = vmatpush.msra.mxu0 %v314
  %873 = vmatpush.msra.mxu0 %v310
  %874 = vmatpush.msra.mxu0 %v306
  %875 = vmatpush.msra.mxu0 %v302
  %876 = vmatpush.msra.mxu0 %v298
  %877 = vmatpush.msra.mxu0 %v294
  %878 = vmatpush.msra.mxu0 %v290
  %879 = vmatpush.msra.mxu0 %v286
  %880 = vmatmul.f32.gmra.mxu0 %v65
  %v881 = vpop.f32.mrf.mxu0
  %v882 = vadd.f32 %v847, %v881
  %883 = vmatmul.f32.gmra.mxu0 %v70
  %v884 = vpop.f32.mrf.mxu0
  %v885 = vadd.f32 %v850, %v884
  %886 = vmatmul.f32.gmra.mxu0 %v75
  %v887 = vpop.f32.mrf.mxu0
  %v888 = vadd.f32 %v853, %v887
  %889 = vmatmul.f32.gmra.mxu0 %v80
  %v890 = vpop.f32.mrf.mxu0
  %v891 = vadd.f32 %v856, %v890
  %892 = vmatmul.f32.gmra.mxu0 %v85
  %v893 = vpop.f32.mrf.mxu0
  %v894 = vadd.f32 %v859, %v893
  %895 = vmatmul.f32.gmra.mxu0 %v90
  %v896 = vpop.f32.mrf.mxu0
  %v897 = vadd.f32 %v862, %v896
  %898 = vdwg.mxu0
  %899 = vmatpush.msra.mxu0 0.0
  %900 = vmatpush.msra.mxu0 0.0
  %901 = vmatpush.msra.mxu0 0.0
  %902 = vmatpush.msra.mxu0 0.0
  %903 = vmatpush.msra.mxu0 0.0
  %904 = vmatpush.msra.mxu0 0.0
  %905 = vmatpush.msra.mxu0 0.0
  %906 = vmatpush.msra.mxu0 0.0
  %907 = vmatpush.msra.mxu0 %v378
  %908 = vmatpush.msra.mxu0 %v374
  %909 = vmatpush.msra.mxu0 %v370
  %910 = vmatpush.msra.mxu0 %v366
  %911 = vmatpush.msra.mxu0 %v362
  %912 = vmatpush.msra.mxu0 %v358
  %913 = vmatpush.msra.mxu0 %v354
  %914 = vmatpush.msra.mxu0 %v350
  %915 = vmatmul.f32.gmra.mxu0 %v392
  %v916 = vpop.f32.mrf.mxu0
  %v917 = vadd.f32 %v882, %v916
  %918 = vmatmul.f32.gmra.mxu0 %v395
  %v919 = vpop.f32.mrf.mxu0
  %v920 = vadd.f32 %v885, %v919
  %921 = vmatmul.f32.gmra.mxu0 %v398
  %v922 = vpop.f32.mrf.mxu0
  %v923 = vadd.f32 %v888, %v922
  %924 = vmatmul.f32.gmra.mxu0 %v401
  %v925 = vpop.f32.mrf.mxu0
  %v926 = vadd.f32 %v891, %v925
  %927 = vmatmul.f32.gmra.mxu0 %v404
  %v928 = vpop.f32.mrf.mxu0
  %v929 = vadd.f32 %v894, %v928
  %930 = vmatmul.f32.gmra.mxu0 %v407
  %v931 = vpop.f32.mrf.mxu0
  %v932 = vadd.f32 %v897, %v931
  %933 = vdwg.mxu0
  %934 = vmatpush.msra.mxu0 %v155
  %935 = vmatpush.msra.mxu0 %v151
  %936 = vmatpush.msra.mxu0 %v147
  %937 = vmatpush.msra.mxu0 %v143
  %938 = vmatpush.msra.mxu0 %v139
  %939 = vmatpush.msra.mxu0 %v135
  %940 = vmatpush.msra.mxu0 %v131
  %941 = vmatpush.msra.mxu0 %v127
  %942 = vmatpush.msra.mxu0 %v123
  %943 = vmatpush.msra.mxu0 %v119
  %944 = vmatpush.msra.mxu0 %v115
  %945 = vmatpush.msra.mxu0 %v111
  %946 = vmatpush.msra.mxu0 %v107
  %947 = vmatpush.msra.mxu0 %v103
  %948 = vmatpush.msra.mxu0 %v99
  %949 = vmatpush.msra.mxu0 %v95
  %950 = vmatmul.f32.gmra.mxu0 %v62
  %v951 = vpop.f32.mrf.mxu0
  %v952 = vadd.f32 %v385, %v951
  %953 = vmatmul.f32.gmra.mxu0 %v67
  %v954 = vpop.f32.mrf.mxu0
  %v955 = vadd.f32 %v385, %v954
  %956 = vmatmul.f32.gmra.mxu0 %v72
  %v957 = vpop.f32.mrf.mxu0
  %v958 = vadd.f32 %v385, %v957
  %959 = vmatmul.f32.gmra.mxu0 %v77
  %v960 = vpop.f32.mrf.mxu0
  %v961 = vadd.f32 %v385, %v960
  %962 = vmatmul.f32.gmra.mxu0 %v82
  %v963 = vpop.f32.mrf.mxu0
  %v964 = vadd.f32 %v385, %v963
  %965 = vmatmul.f32.gmra.mxu0 %v87
  %v966 = vpop.f32.mrf.mxu0
  %v967 = vadd.f32 %v385, %v966
  %968 = vdwg.mxu0
  %969 = vmatpush.msra.mxu0 %v219
  %970 = vmatpush.msra.mxu0 %v215
  %971 = vmatpush.msra.mxu0 %v211
  %972 = vmatpush.msra.mxu0 %v207
  %973 = vmatpush.msra.mxu0 %v203
  %974 = vmatpush.msra.mxu0 %v199
  %975 = vmatpush.msra.mxu0 %v195
  %976 = vmatpush.msra.mxu0 %v191
  %977 = vmatpush.msra.mxu0 %v187
  %978 = vmatpush.msra.mxu0 %v183
  %979 = vmatpush.msra.mxu0 %v179
  %980 = vmatpush.msra.mxu0 %v175
  %981 = vmatpush.msra.mxu0 %v171
  %982 = vmatpush.msra.mxu0 %v167
  %983 = vmatpush.msra.mxu0 %v163
  %984 = vmatpush.msra.mxu0 %v159
  %985 = vmatmul.f32.gmra.mxu0 %v63
  %v986 = vpop.f32.mrf.mxu0
  %v987 = vadd.f32 %v952, %v986
  %988 = vmatmul.f32.gmra.mxu0 %v68
  %v989 = vpop.f32.mrf.mxu0
  %v990 = vadd.f32 %v955, %v989
  %991 = vmatmul.f32.gmra.mxu0 %v73
  %v992 = vpop.f32.mrf.mxu0
  %v993 = vadd.f32 %v958, %v992
  %994 = vmatmul.f32.gmra.mxu0 %v78
  %v995 = vpop.f32.mrf.mxu0
  %v996 = vadd.f32 %v961, %v995
  %997 = vmatmul.f32.gmra.mxu0 %v83
  %v998 = vpop.f32.mrf.mxu0
  %v999 = vadd.f32 %v964, %v998
  %1000 = vmatmul.f32.gmra.mxu0 %v88
  %v1001 = vpop.f32.mrf.mxu0
  %v1002 = vadd.f32 %v967, %v1001
  %1003 = vdwg.mxu0
  %1004 = vmatpush.msra.mxu0 %v283
  %1005 = vmatpush.msra.mxu0 %v279
  %1006 = vmatpush.msra.mxu0 %v275
  %1007 = vmatpush.msra.mxu0 %v271
  %1008 = vmatpush.msra.mxu0 %v267
  %1009 = vmatpush.msra.mxu0 %v263
  %1010 = vmatpush.msra.mxu0 %v259
  %1011 = vmatpush.msra.mxu0 %v255
  %1012 = vmatpush.msra.mxu0 %v251
  %1013 = vmatpush.msra.mxu0 %v247
  %1014 = vmatpush.msra.mxu0 %v243
  %1015 = vmatpush.msra.mxu0 %v239
  %1016 = vmatpush.msra.mxu0 %v235
  %1017 = vmatpush.msra.mxu0 %v231
  %1018 = vmatpush.msra.mxu0 %v227
  %1019 = vmatpush.msra.mxu0 %v223
  %1020 = vmatmul.f32.gmra.mxu0 %v64
  %v1021 = vpop.f32.mrf.mxu0
  %v1022 = vadd.f32 %v987, %v1021
  %1023 = vmatmul.f32.gmra.mxu0 %v69
  %v1024 = vpop.f32.mrf.mxu0
  %v1025 = vadd.f32 %v990, %v1024
  %1026 = vmatmul.f32.gmra.mxu0 %v74
  %v1027 = vpop.f32.mrf.mxu0
  %v1028 = vadd.f32 %v993, %v1027
  %1029 = vmatmul.f32.gmra.mxu0 %v79
  %v1030 = vpop.f32.mrf.mxu0
  %v1031 = vadd.f32 %v996, %v1030
  %1032 = vmatmul.f32.gmra.mxu0 %v84
  %v1033 = vpop.f32.mrf.mxu0
  %v1034 = vadd.f32 %v999, %v1033
  %1035 = vmatmul.f32.gmra.mxu0 %v89
  %v1036 = vpop.f32.mrf.mxu0
  %v1037 = vadd.f32 %v1002, %v1036
  %1038 = vdwg.mxu0
  %1039 = vmatpush.msra.mxu0 %v347
  %1040 = vmatpush.msra.mxu0 %v343
  %1041 = vmatpush.msra.mxu0 %v339
  %1042 = vmatpush.msra.mxu0 %v335
  %1043 = vmatpush.msra.mxu0 %v331
  %1044 = vmatpush.msra.mxu0 %v327
  %1045 = vmatpush.msra.mxu0 %v323
  %1046 = vmatpush.msra.mxu0 %v319
  %1047 = vmatpush.msra.mxu0 %v315
  %1048 = vmatpush.msra.mxu0 %v311
  %1049 = vmatpush.msra.mxu0 %v307
  %1050 = vmatpush.msra.mxu0 %v303
  %1051 = vmatpush.msra.mxu0 %v299
  %1052 = vmatpush.msra.mxu0 %v295
  %1053 = vmatpush.msra.mxu0 %v291
  %1054 = vmatpush.msra.mxu0 %v287
  %1055 = vmatmul.f32.gmra.mxu0 %v65
  %v1056 = vpop.f32.mrf.mxu0
  %v1057 = vadd.f32 %v1022, %v1056
  %1058 = vmatmul.f32.gmra.mxu0 %v70
  %v1059 = vpop.f32.mrf.mxu0
  %v1060 = vadd.f32 %v1025, %v1059
  %1061 = vmatmul.f32.gmra.mxu0 %v75
  %v1062 = vpop.f32.mrf.mxu0
  %v1063 = vadd.f32 %v1028, %v1062
  %1064 = vmatmul.f32.gmra.mxu0 %v80
  %v1065 = vpop.f32.mrf.mxu0
  %v1066 = vadd.f32 %v1031, %v1065
  %1067 = vmatmul.f32.gmra.mxu0 %v85
  %v1068 = vpop.f32.mrf.mxu0
  %v1069 = vadd.f32 %v1034, %v1068
  %1070 = vmatmul.f32.gmra.mxu0 %v90
  %v1071 = vpop.f32.mrf.mxu0
  %v1072 = vadd.f32 %v1037, %v1071
  %1073 = vdwg.mxu0
  %1074 = vmatpush.msra.mxu0 0.0
  %1075 = vmatpush.msra.mxu0 0.0
  %1076 = vmatpush.msra.mxu0 0.0
  %1077 = vmatpush.msra.mxu0 0.0
  %1078 = vmatpush.msra.mxu0 0.0
  %1079 = vmatpush.msra.mxu0 0.0
  %1080 = vmatpush.msra.mxu0 0.0
  %1081 = vmatpush.msra.mxu0 0.0
  %1082 = vmatpush.msra.mxu0 %v379
  %1083 = vmatpush.msra.mxu0 %v375
  %1084 = vmatpush.msra.mxu0 %v371
  %1085 = vmatpush.msra.mxu0 %v367
  %1086 = vmatpush.msra.mxu0 %v363
  %1087 = vmatpush.msra.mxu0 %v359
  %1088 = vmatpush.msra.mxu0 %v355
  %1089 = vmatpush.msra.mxu0 %v351
  %1090 = vmatmul.f32.gmra.mxu0 %v392
  %v1091 = vpop.f32.mrf.mxu0
  %v1092 = vadd.f32 %v1057, %v1091
  %1093 = vmatmul.f32.gmra.mxu0 %v395
  %v1094 = vpop.f32.mrf.mxu0
  %v1095 = vadd.f32 %v1060, %v1094
  %1096 = vmatmul.f32.gmra.mxu0 %v398
  %v1097 = vpop.f32.mrf.mxu0
  %v1098 = vadd.f32 %v1063, %v1097
  %1099 = vmatmul.f32.gmra.mxu0 %v401
  %v1100 = vpop.f32.mrf.mxu0
  %v1101 = vadd.f32 %v1066, %v1100
  %1102 = vmatmul.f32.gmra.mxu0 %v404
  %v1103 = vpop.f32.mrf.mxu0
  %v1104 = vadd.f32 %v1069, %v1103
  %1105 = vmatmul.f32.gmra.mxu0 %v407
  %v1106 = vpop.f32.mrf.mxu0
  %v1107 = vadd.f32 %v1072, %v1106
  %1108 = vdwg.mxu0
  %v1109 = vmax.f32 %v567, 0.0
  %v1110 = vmax.f32 %v742, 0.0
  %v1111 = vmax.f32 %v917, 0.0
  %v1112 = vmax.f32 %v1092, 0.0
  %v1113 = vmax.f32 %v570, 0.0
  %v1114 = vmax.f32 %v745, 0.0
  %v1115 = vmax.f32 %v920, 0.0
  %v1116 = vmax.f32 %v1095, 0.0
  %v1117 = vmax.f32 %v573, 0.0
  %v1118 = vmax.f32 %v748, 0.0
  %v1119 = vmax.f32 %v923, 0.0
  %v1120 = vmax.f32 %v1098, 0.0
  %v1121 = vmax.f32 %v576, 0.0
  %v1122 = vmax.f32 %v751, 0.0
  %v1123 = vmax.f32 %v926, 0.0
  %v1124 = vmax.f32 %v1101, 0.0
  %v1125 = vmax.f32 %v579, 0.0
  %v1126 = vmax.f32 %v754, 0.0
  %v1127 = vmax.f32 %v929, 0.0
  %v1128 = vmax.f32 %v1104, 0.0
  %v1129 = vmax.f32 %v582, 0.0
  %v1130 = vmax.f32 %v757, 0.0
  %v1131 = vmax.f32 %v932, 0.0
  %v1132 = vmax.f32 %v1107, 0.0
  %v1133 = vld [vmem:[%s6] sm:$0xff]
  %v1134 = vld [vmem:[%s6 + $0x8] sm:$0xff]
  %v1135 = vld [vmem:[%s6 + $0x10] sm:$0xff]
  %v1136 = vld [vmem:[%s6 + $0x18] sm:$0xff]
  %v1137 = vld [vmem:[%s6 + $0x20] sm:$0xff]
  %v1138 = vld [vmem:[%s6 + $0x28] sm:$0xff]
  %v1139 = vld [vmem:[%s6 + $0x30] sm:$0xff]
  %v1140 = vld [vmem:[%s6 + $0x38] sm:$0xff]
  %v1141 = vld [vmem:[%s6 + $0x40] sm:$0xff]
  %v1142 = vld [vmem:[%s6 + $0x48] sm:$0xff]
  %v1143 = vld [vmem:[%s6 + $0x50] sm:$0xff]
  %v1144 = vld [vmem:[%s6 + $0x58] sm:$0xff]
  %v1145 = vld [vmem:[%s6 + $0x60] sm:$0xff]
  %v1146 = vld [vmem:[%s6 + $0x68] sm:$0xff]
  %v1147 = vld [vmem:[%s6 + $0x70] sm:$0xff]
  %v1148 = vld [vmem:[%s6 + $0x78] sm:$0xff]
  %v1149 = vld [vmem:[%s6 + $0x80] sm:$0xff]
  %v1150 = vld [vmem:[%s6 + $0x88] sm:$0xff]
  %v1151 = vld [vmem:[%s6 + $0x90] sm:$0xff]
  %v1152 = vld [vmem:[%s6 + $0x98] sm:$0xff]
  %v1153 = vld [vmem:[%s6 + $0xa0] sm:$0xff]
  %v1154 = vld [vmem:[%s6 + $0xa8] sm:$0xff]
  %v1155 = vld [vmem:[%s6 + $0xb0] sm:$0xff]
  %v1156 = vld [vmem:[%s6 + $0xb8] sm:$0xff]
  %v1157 = vld [vmem:[%s6 + $0xc0] sm:$0xff]
  %v1158 = vld [vmem:[%s6 + $0xc8] sm:$0xff]
  %v1159 = vld [vmem:[%s6 + $0xd0] sm:$0xff]
  %v1160 = vld [vmem:[%s6 + $0xd8] sm:$0xff]
  %v1161 = vld [vmem:[%s6 + $0xe0] sm:$0xff]
  %v1162 = vld [vmem:[%s6 + $0xe8] sm:$0xff]
  %v1163 = vld [vmem:[%s6 + $0xf0] sm:$0xff]
  %v1164 = vld [vmem:[%s6 + $0xf8] sm:$0xff]
  %v1165 = vld [vmem:[%s6 + $0x100] sm:$0xff]
  %v1166 = vld [vmem:[%s6 + $0x108] sm:$0xff]
  %v1167 = vld [vmem:[%s6 + $0x110] sm:$0xff]
  %v1168 = vld [vmem:[%s6 + $0x118] sm:$0xff]
  %v1169 = vld [vmem:[%s6 + $0x120] sm:$0xff]
  %v1170 = vld [vmem:[%s6 + $0x128] sm:$0xff]
  %v1171 = vld [vmem:[%s6 + $0x130] sm:$0xff]
  %v1172 = vld [vmem:[%s6 + $0x138] sm:$0xff]
  %v1173 = vld [vmem:[%s6 + $0x140] sm:$0xff]
  %v1174 = vld [vmem:[%s6 + $0x148] sm:$0xff]
  %v1175 = vld [vmem:[%s6 + $0x150] sm:$0xff]
  %v1176 = vld [vmem:[%s6 + $0x158] sm:$0xff]
  %v1177 = vld [vmem:[%s6 + $0x160] sm:$0xff]
  %v1178 = vld [vmem:[%s6 + $0x168] sm:$0xff]
  %v1179 = vld [vmem:[%s6 + $0x170] sm:$0xff]
  %v1180 = vld [vmem:[%s6 + $0x178] sm:$0xff]
  %v1181 = vld [vmem:[%s6 + $0x180] sm:$0xff]
  %v1182 = vld [vmem:[%s6 + $0x188] sm:$0xff]
  %v1183 = vld [vmem:[%s6 + $0x190] sm:$0xff]
  %v1184 = vld [vmem:[%s6 + $0x198] sm:$0xff]
  %v1185 = vld [vmem:[%s6 + $0x1a0] sm:$0xff]
  %v1186 = vld [vmem:[%s6 + $0x1a8] sm:$0xff]
  %v1187 = vld [vmem:[%s6 + $0x1b0] sm:$0xff]
  %v1188 = vld [vmem:[%s6 + $0x1b8] sm:$0xff]
  %v1189 = vld [vmem:[%s6 + $0x1c0] sm:$0xff]
  %v1190 = vld [vmem:[%s6 + $0x1c8] sm:$0xff]
  %v1191 = vld [vmem:[%s6 + $0x1d0] sm:$0xff]
  %v1192 = vld [vmem:[%s6 + $0x1d8] sm:$0xff]
  %v1193 = vld [vmem:[%s6 + $0x1e0] sm:$0xff]
  %v1194 = vld [vmem:[%s6 + $0x1e8] sm:$0xff]
  %v1195 = vld [vmem:[%s6 + $0x1f0] sm:$0xff]
  %v1196 = vld [vmem:[%s6 + $0x1f8] sm:$0xff]
  %v1197 = vld [vmem:[%s7] sm:$0x1]
  %v1199 = vperm.slane %v1197, 0
  %1201 = vmatpush.msra.mxu0 %v1148
  %1202 = vmatpush.msra.mxu0 %v1147
  %1203 = vmatpush.msra.mxu0 %v1146
  %1204 = vmatpush.msra.mxu0 %v1145
  %1205 = vmatpush.msra.mxu0 %v1144
  %1206 = vmatpush.msra.mxu0 %v1143
  %1207 = vmatpush.msra.mxu0 %v1142
  %1208 = vmatpush.msra.mxu0 %v1141
  %1209 = vmatpush.msra.mxu0 %v1140
  %1210 = vmatpush.msra.mxu0 %v1139
  %1211 = vmatpush.msra.mxu0 %v1138
  %1212 = vmatpush.msra.mxu0 %v1137
  %1213 = vmatpush.msra.mxu0 %v1136
  %1214 = vmatpush.msra.mxu0 %v1135
  %1215 = vmatpush.msra.mxu0 %v1134
  %1216 = vmatpush.msra.mxu0 %v1133
  %1217 = vmatmul.f32.gmra.mxu0 %v1109
  %v1218 = vpop.f32.mrf.mxu0
  %v1219 = vadd.f32 %v1199, %v1218
  %1220 = vmatmul.f32.gmra.mxu0 %v1113
  %v1221 = vpop.f32.mrf.mxu0
  %v1222 = vadd.f32 %v1199, %v1221
  %1223 = vmatmul.f32.gmra.mxu0 %v1117
  %v1224 = vpop.f32.mrf.mxu0
  %v1225 = vadd.f32 %v1199, %v1224
  %1226 = vmatmul.f32.gmra.mxu0 %v1121
  %v1227 = vpop.f32.mrf.mxu0
  %v1228 = vadd.f32 %v1199, %v1227
  %1229 = vmatmul.f32.gmra.mxu0 %v1125
  %v1230 = vpop.f32.mrf.mxu0
  %v1231 = vadd.f32 %v1199, %v1230
  %1232 = vmatmul.f32.gmra.mxu0 %v1129
  %v1233 = vpop.f32.mrf.mxu0
  %v1234 = vadd.f32 %v1199, %v1233
  %1235 = vdwg.mxu0
  %1236 = vmatpush.msra.mxu0 %v1164
  %1237 = vmatpush.msra.mxu0 %v1163
  %1238 = vmatpush.msra.mxu0 %v1162
  %1239 = vmatpush.msra.mxu0 %v1161
  %1240 = vmatpush.msra.mxu0 %v1160
  %1241 = vmatpush.msra.mxu0 %v1159
  %1242 = vmatpush.msra.mxu0 %v1158
  %1243 = vmatpush.msra.mxu0 %v1157
  %1244 = vmatpush.msra.mxu0 %v1156
  %1245 = vmatpush.msra.mxu0 %v1155
  %1246 = vmatpush.msra.mxu0 %v1154
  %1247 = vmatpush.msra.mxu0 %v1153
  %1248 = vmatpush.msra.mxu0 %v1152
  %1249 = vmatpush.msra.mxu0 %v1151
  %1250 = vmatpush.msra.mxu0 %v1150
  %1251 = vmatpush.msra.mxu0 %v1149
  %1252 = vmatmul.f32.gmra.mxu0 %v1110
  %v1253 = vpop.f32.mrf.mxu0
  %v1254 = vadd.f32 %v1219, %v1253
  %1255 = vmatmul.f32.gmra.mxu0 %v1114
  %v1256 = vpop.f32.mrf.mxu0
  %v1257 = vadd.f32 %v1222, %v1256
  %1258 = vmatmul.f32.gmra.mxu0 %v1118
  %v1259 = vpop.f32.mrf.mxu0
  %v1260 = vadd.f32 %v1225, %v1259
  %1261 = vmatmul.f32.gmra.mxu0 %v1122
  %v1262 = vpop.f32.mrf.mxu0
  %v1263 = vadd.f32 %v1228, %v1262
  %1264 = vmatmul.f32.gmra.mxu0 %v1126
  %v1265 = vpop.f32.mrf.mxu0
  %v1266 = vadd.f32 %v1231, %v1265
  %1267 = vmatmul.f32.gmra.mxu0 %v1130
  %v1268 = vpop.f32.mrf.mxu0
  %v1269 = vadd.f32 %v1234, %v1268
  %1270 = vdwg.mxu0
  %1271 = vmatpush.msra.mxu0 %v1180
  %1272 = vmatpush.msra.mxu0 %v1179
  %1273 = vmatpush.msra.mxu0 %v1178
  %1274 = vmatpush.msra.mxu0 %v1177
  %1275 = vmatpush.msra.mxu0 %v1176
  %1276 = vmatpush.msra.mxu0 %v1175
  %1277 = vmatpush.msra.mxu0 %v1174
  %1278 = vmatpush.msra.mxu0 %v1173
  %1279 = vmatpush.msra.mxu0 %v1172
  %1280 = vmatpush.msra.mxu0 %v1171
  %1281 = vmatpush.msra.mxu0 %v1170
  %1282 = vmatpush.msra.mxu0 %v1169
  %1283 = vmatpush.msra.mxu0 %v1168
  %1284 = vmatpush.msra.mxu0 %v1167
  %1285 = vmatpush.msra.mxu0 %v1166
  %1286 = vmatpush.msra.mxu0 %v1165
  %1287 = vmatmul.f32.gmra.mxu0 %v1111
  %v1288 = vpop.f32.mrf.mxu0
  %v1289 = vadd.f32 %v1254, %v1288
  %1290 = vmatmul.f32.gmra.mxu0 %v1115
  %v1291 = vpop.f32.mrf.mxu0
  %v1292 = vadd.f32 %v1257, %v1291
  %1293 = vmatmul.f32.gmra.mxu0 %v1119
  %v1294 = vpop.f32.mrf.mxu0
  %v1295 = vadd.f32 %v1260, %v1294
  %1296 = vmatmul.f32.gmra.mxu0 %v1123
  %v1297 = vpop.f32.mrf.mxu0
  %v1298 = vadd.f32 %v1263, %v1297
  %1299 = vmatmul.f32.gmra.mxu0 %v1127
  %v1300 = vpop.f32.mrf.mxu0
  %v1301 = vadd.f32 %v1266, %v1300
  %1302 = vmatmul.f32.gmra.mxu0 %v1131
  %v1303 = vpop.f32.mrf.mxu0
  %v1304 = vadd.f32 %v1269, %v1303
  %1305 = vdwg.mxu0
  %1306 = vmatpush.msra.mxu0 %v1196
  %1307 = vmatpush.msra.mxu0 %v1195
  %1308 = vmatpush.msra.mxu0 %v1194
  %1309 = vmatpush.msra.mxu0 %v1193
  %1310 = vmatpush.msra.mxu0 %v1192
  %1311 = vmatpush.msra.mxu0 %v1191
  %1312 = vmatpush.msra.mxu0 %v1190
  %1313 = vmatpush.msra.mxu0 %v1189
  %1314 = vmatpush.msra.mxu0 %v1188
  %1315 = vmatpush.msra.mxu0 %v1187
  %1316 = vmatpush.msra.mxu0 %v1186
  %1317 = vmatpush.msra.mxu0 %v1185
  %1318 = vmatpush.msra.mxu0 %v1184
  %1319 = vmatpush.msra.mxu0 %v1183
  %1320 = vmatpush.msra.mxu0 %v1182
  %1321 = vmatpush.msra.mxu0 %v1181
  %1322 = vmatmul.f32.gmra.mxu0 %v1112
  %v1323 = vpop.f32.mrf.mxu0
  %v1324 = vadd.f32 %v1289, %v1323
  %1325 = vmatmul.f32.gmra.mxu0 %v1116
  %v1326 = vpop.f32.mrf.mxu0
  %v1327 = vadd.f32 %v1292, %v1326
  %1328 = vmatmul.f32.gmra.mxu0 %v1120
  %v1329 = vpop.f32.mrf.mxu0
  %v1330 = vadd.f32 %v1295, %v1329
  %1331 = vmatmul.f32.gmra.mxu0 %v1124
  %v1332 = vpop.f32.mrf.mxu0
  %v1333 = vadd.f32 %v1298, %v1332
  %1334 = vmatmul.f32.gmra.mxu0 %v1128
  %v1335 = vpop.f32.mrf.mxu0
  %v1336 = vadd.f32 %v1301, %v1335
  %1337 = vmatmul.f32.gmra.mxu0 %v1132
  %v1338 = vpop.f32.mrf.mxu0
  %v1339 = vadd.f32 %v1304, %v1338
  %1340 = vdwg.mxu0
  %v1341 = vadd.f32 %v31, %v1324
  %v1342 = vadd.f32 %v32, %v1327
  %v1343 = vadd.f32 %v33, %v1330
  %v1344 = vadd.f32 %v34, %v1333
  %v1345 = vadd.f32 %v35, %v1336
  %v1346 = vadd.f32 %v36, %v1339
  %1347 = vst [vmem:[%s8] sm:$0xff] %v1341
  %1348 = vst [vmem:[%s8 + $0x8] sm:$0xff] %v1342
  %1349 = vst [vmem:[%s8 + $0x10] sm:$0xff] %v1343
  %1350 = vst [vmem:[%s8 + $0x18] sm:$0xff] %v1344
  %1351 = vst [vmem:[%s8 + $0x20] sm:$0xff] %v1345
  %1352 = vst [vmem:[%s8 + $0x28] sm:$0xff] %v1346
  // Predicated region
  $region34: #{primal_block.1} parent=0 // pred_check
    _
  $region35: #{primal_block.1} parent=0 // pred_check_branch
    %1354 = sbr.rel (0) target = $region37
  $region36: #{primal_block.1} parent=0 // pred_region
    _
  $region37: #{primal_block.1} parent=0 // pred_fallthru
    _
  // Predicated region
  $region38: #{primal_block.1} parent=0 // pred_check
    _
  $region39: #{primal_block.1} parent=0 // pred_check_branch
    %1356 = sbr.rel (0) target = $region41
  $region40: #{primal_block.1} parent=0 // pred_region
    _
  $region41: #{primal_block.1} parent=0 // pred_fallthru
    _
  // Predicated region
  $region42: #{primal_block.1} parent=0 // pred_check
    _
  $region43: #{primal_block.1} parent=0 // pred_check_branch
    %1358 = sbr.rel (0) target = $region45
  $region44: #{primal_block.1} parent=0 // pred_region
    _
  $region45: #{primal_block.1} parent=0 // pred_fallthru
    _
  // Predicated region
  $region46: #{primal_block.1} parent=0 // pred_check
    _
  $region47: #{primal_block.1} parent=0 // pred_check_branch
    %1360 = sbr.rel (0) target = $region49
  $region48: #{primal_block.1} parent=0 // pred_region
    _
  $region49: #{primal_block.1} parent=0 // pred_fallthru
    _

</llo_original>
